<compile_context>
chip_gen: v7x
topology: tpu7x:2x2x1
jax: 0.10.0
libtpu: 0.0.40
codegen_flags: <defaults>
</compile_context>

<pallas_src>
from functools import partial

import jax
import jax.numpy as jnp
from jax.experimental import pallas as pl
from jax.experimental.pallas import tpu as pltpu


def _cond_scalar_kernel(
    xs_ref, xc_ref,                     # (S_in, TB), (C_in, TB)   streamed activations (bf16)
    w1s_ref, b1s_ref, w2s_ref, b2s_ref, # state trunk   (resident f32)
    w1c_ref, b1c_ref, w2c_ref, b2c_ref, # cond trunk    (resident f32)
    w1fs_ref, w1fc_ref, b1f_ref,        # final layer 1, split into the two column blocks
    w2f_ref, b2f_ref,                   # final layer 2: (1, Hf), (1, 1)
    out_ref,                            # (1, TB)  lane-dense output tile
):
    f32 = jnp.float32
    xs = xs_ref[...].astype(f32)
    xc = xc_ref[...].astype(f32)

    # state_module: Linear -> ReLU -> Linear   (feature-major: W^T @ X)
    hs = jnp.maximum(jnp.dot(w1s_ref[...], xs, preferred_element_type=f32) + b1s_ref[...], 0.0)
    so = jnp.dot(w2s_ref[...], hs, preferred_element_type=f32) + b2s_ref[...]

    # conditioning_module: Linear -> ReLU -> Linear
    hc = jnp.maximum(jnp.dot(w1c_ref[...], xc, preferred_element_type=f32) + b1c_ref[...], 0.0)
    co = jnp.dot(w2c_ref[...], hc, preferred_element_type=f32) + b2c_ref[...]

    # final_module layer 1.  torch.cat((state_out, cond_out), -1) @ W1f is computed exactly
    # as W1f_s^T @ so + W1f_c^T @ co, so no concat / relayout is ever materialized.
    hf = jnp.maximum(
        jnp.dot(w1fs_ref[...], so, preferred_element_type=f32)
        + jnp.dot(w1fc_ref[...], co, preferred_element_type=f32)
        + b1f_ref[...],
        0.0,
    )

    # final_module layer 2 (out_features == 1): (1, Hf) @ (Hf, TB) -> (1, TB), lane-dense.
    out_ref[...] = jnp.dot(w2f_ref[...], hf, preferred_element_type=f32) + b2f_ref[...]


def prepare_params(params):
    """One-time packing: transpose to (out, in) for feature-major math, biases as columns.

    Hoisted out of the per-call path (review point: no per-forward weight packing).
    """
    (w1s, b1s, w2s, b2s, w1c, b1c, w2c, b2c, w1f, b1f, w2f, b2f) = params
    s_out = w2s.shape[1]

    col = lambda b: jnp.asarray(b, jnp.float32).reshape(-1, 1)
    t = lambda w: jnp.asarray(w, jnp.float32).T

    return (
        t(w1s), col(b1s), t(w2s), col(b2s),          # state trunk
        t(w1c), col(b1c), t(w2c), col(b2c),          # conditioning trunk
        t(w1f[:s_out]), t(w1f[s_out:]), col(b1f),    # final layer 1, column-block split
        t(w2f), col(b2f),                            # final layer 2
    )


def _pick_tile(batch, tile_b):
    if batch % 128 != 0:
        raise ValueError("batch size must be a multiple of 128 (lane-dense batch layout)")
    min_steps = 2 if batch >= 256 else 1             # keep both v7x TensorCores busy
    tb = min(tile_b, batch // min_steps)
    tb = max(128, (tb // 128) * 128)
    while batch % tb != 0:
        tb -= 128
    return tb


@partial(jax.jit, static_argnames=("tile_b", "activation_dtype"))
def conditional_scalar_estimator_forward(
    states, conditioning, prepared_params, *, tile_b=2048, activation_dtype=jnp.bfloat16
):
    """states: (B, S_in) f32, conditioning: (B, C_in) f32 -> (B, 1) f32."""
    B, s_in = states.shape
    c_in = conditioning.shape[1]

    tb = _pick_tile(B, tile_b)
    grid = (B // tb,)

    # Feature-major (batch-in-lanes) activation streams; bf16 halves the HBM traffic.
    # (Callers that can supply (feat, B) data directly avoid even this transpose pass.)
    act_dt = activation_dtype if activation_dtype is not None else states.dtype
    xs_t = states.T.astype(act_dt)          # (S_in, B)
    xc_t = conditioning.T.astype(act_dt)    # (C_in, B)

    act_spec = lambda d: pl.BlockSpec((d, tb), lambda i: (0, i))
    resident = lambda p: pl.BlockSpec(p.shape, lambda i: (0, 0))   # weights stay in VMEM

    in_specs = [act_spec(s_in), act_spec(c_in)] + [resident(p) for p in prepared_params]
    out_specs = pl.BlockSpec((1, tb), lambda i: (0, i))            # lane-dense output slab

    out = pl.pallas_call(
        _cond_scalar_kernel,
        out_shape=jax.ShapeDtypeStruct((1, B), jnp.float32),
        grid=grid,
        in_specs=in_specs,
        out_specs=out_specs,
        compiler_params=pltpu.CompilerParams(
            dimension_semantics=("parallel",),      # shard batch tiles across TCs (v7x)
            vmem_limit_bytes=32 * 1024 * 1024,      # safe on v5e/v6e/v7x; usage is tiny
        ),
    )(xs_t, xc_t, *prepared_params)

    return out.reshape(B, 1)


def _init_params(key, s_in, c_in, hidden, s_out, c_out, f_out):
    """Deterministic synthetic weights. Stored as (in, out) = transpose of torch Linear."""
    keys = jax.random.split(key, 12)
    scale = 0.1

    def w(k, i, o):
        return scale * jax.random.normal(k, (i, o), dtype=jnp.float32)

    def b(k, o):
        return scale * jax.random.normal(k, (o,), dtype=jnp.float32)

    w1s, b1s = w(keys[0], s_in, hidden), b(keys[1], hidden)
    w2s, b2s = w(keys[2], hidden, s_out), b(keys[3], s_out)
    w1c, b1c = w(keys[4], c_in, hidden), b(keys[5], hidden)
    w2c, b2c = w(keys[6], hidden, c_out), b(keys[7], c_out)
    w1f, b1f = w(keys[8], s_out + c_out, hidden), b(keys[9], hidden)
    w2f, b2f = w(keys[10], hidden, f_out), b(keys[11], f_out)
    return (w1s, b1s, w2s, b2s, w1c, b1c, w2c, b2c, w1f, b1f, w2f, b2f)


def _reference_forward(states, conditioning, params):
    """Pure-JAX reference mirroring the PyTorch module exactly (f32 math)."""
    (w1s, b1s, w2s, b2s, w1c, b1c, w2c, b2c, w1f, b1f, w2f, b2f) = params
    relu = lambda v: jnp.maximum(v, 0.0)
    s_out = relu(states @ w1s + b1s) @ w2s + b2s
    c_out = relu(conditioning @ w1c + b1c) @ w2c + b2c
    cat = jnp.concatenate([s_out, c_out], axis=-1)
    out = relu(cat @ w1f + b1f) @ w2f + b2f
    # out.shape[-1] == 1 -> reduction branch skipped (matches torch forward)
    return out


if __name__ == "__main__":
    # Small but grid-exercising shapes: batch=512 -> 2 grid steps of 256 lane-dense rows,
    # state feature dim=16, conditioning dim=8, hidden=32, scalar output.
    B, S_IN, C_IN, HID = 512, 16, 8, 32
    S_OUT, C_OUT, F_OUT = 32, 16, 1   # F_OUT == 1 -> scalar output, no reduction needed
    # TODO(synk): the torch.mean/sum/prod `reduction` path only fires when final_module
    # output dim != 1; with F_OUT=1 it is skipped exactly as in the PyTorch forward.

    key = jax.random.PRNGKey(0)
    k_x, k_c, k_p = jax.random.split(key, 3)
    states = jax.random.normal(k_x, (B, S_IN), dtype=jnp.float32)
    conditioning = jax.random.normal(k_c, (B, C_IN), dtype=jnp.float32)
    params = _init_params(k_p, S_IN, C_IN, HID, S_OUT, C_OUT, F_OUT)
    prepared = prepare_params(params)   # one-time packing, outside the forward path

    out = conditional_scalar_estimator_forward(states, conditioning, prepared)
    out = jax.block_until_ready(out)
    assert out.shape == (B, 1), out.shape

    # Reference with matching input precision (bf16-rounded activations, f32 math):
    # the kernel streams activations as bf16 but does every dot/bias/ReLU in f32.
    s_bf = states.astype(jnp.bfloat16).astype(jnp.float32)
    c_bf = conditioning.astype(jnp.bfloat16).astype(jnp.float32)
    ref = _reference_forward(s_bf, c_bf, params)
    assert jnp.allclose(out, ref, atol=1e-4, rtol=1e-4), (
        float(jnp.max(jnp.abs(out - ref))))

    print("KERNEL_OK")
</pallas_src>

<mosaic_0001>
module attributes {stable_mosaic.version = 11 : i64} {
  func.func @_cond_scalar_kernel(%arg0: i32, %arg1: memref<16x256xbf16, #tpu.memory_space<vmem>>, %arg2: memref<8x256xbf16, #tpu.memory_space<vmem>>, %arg3: memref<32x16xf32, #tpu.memory_space<vmem>>, %arg4: memref<32x1xf32, #tpu.memory_space<vmem>>, %arg5: memref<32x32xf32, #tpu.memory_space<vmem>>, %arg6: memref<32x1xf32, #tpu.memory_space<vmem>>, %arg7: memref<32x8xf32, #tpu.memory_space<vmem>>, %arg8: memref<32x1xf32, #tpu.memory_space<vmem>>, %arg9: memref<16x32xf32, #tpu.memory_space<vmem>>, %arg10: memref<16x1xf32, #tpu.memory_space<vmem>>, %arg11: memref<32x32xf32, #tpu.memory_space<vmem>>, %arg12: memref<32x16xf32, #tpu.memory_space<vmem>>, %arg13: memref<32x1xf32, #tpu.memory_space<vmem>>, %arg14: memref<1x32xf32, #tpu.memory_space<vmem>>, %arg15: memref<1x1xf32, #tpu.memory_space<vmem>>, %arg16: memref<1x256xf32, #tpu.memory_space<vmem>>) attributes {dimension_semantics = [#tpu.dimension_semantics<parallel>], iteration_bounds = array<i64: 2>, scalar_prefetch = 0 : i64, scratch_operands = 0 : i64, tpu.core_type = #tpu.core_type<tc>, window_params = [{transform_indices = @transform_0, window_bounds = array<i64: 16, 256>}, {transform_indices = @transform_1, window_bounds = array<i64: 8, 256>}, {pipeline_mode = #tpu.pipeline_mode<synchronous>, transform_indices = @transform_2, window_bounds = array<i64: 32, 16>}, {pipeline_mode = #tpu.pipeline_mode<synchronous>, transform_indices = @transform_3, window_bounds = array<i64: 32, 1>}, {pipeline_mode = #tpu.pipeline_mode<synchronous>, transform_indices = @transform_4, window_bounds = array<i64: 32, 32>}, {pipeline_mode = #tpu.pipeline_mode<synchronous>, transform_indices = @transform_5, window_bounds = array<i64: 32, 1>}, {pipeline_mode = #tpu.pipeline_mode<synchronous>, transform_indices = @transform_6, window_bounds = array<i64: 32, 8>}, {pipeline_mode = #tpu.pipeline_mode<synchronous>, transform_indices = @transform_7, window_bounds = array<i64: 32, 1>}, {pipeline_mode = #tpu.pipeline_mode<synchronous>, transform_indices = @transform_8, window_bounds = array<i64: 16, 32>}, {pipeline_mode = #tpu.pipeline_mode<synchronous>, transform_indices = @transform_9, window_bounds = array<i64: 16, 1>}, {pipeline_mode = #tpu.pipeline_mode<synchronous>, transform_indices = @transform_10, window_bounds = array<i64: 32, 32>}, {pipeline_mode = #tpu.pipeline_mode<synchronous>, transform_indices = @transform_11, window_bounds = array<i64: 32, 16>}, {pipeline_mode = #tpu.pipeline_mode<synchronous>, transform_indices = @transform_12, window_bounds = array<i64: 32, 1>}, {pipeline_mode = #tpu.pipeline_mode<synchronous>, transform_indices = @transform_13, window_bounds = array<i64: 1, 32>}, {pipeline_mode = #tpu.pipeline_mode<synchronous>, transform_indices = @transform_14, window_bounds = array<i64: 1, 1>}, {transform_indices = @transform_15, window_bounds = array<i64: 1, 256>}]} {
    %c0 = arith.constant 0 : index
    %c0_0 = arith.constant 0 : index
    %0 = vector.load %arg1[%c0, %c0_0] : memref<16x256xbf16, #tpu.memory_space<vmem>>, vector<16x256xbf16>
    %1 = arith.extf %0 : vector<16x256xbf16> to vector<16x256xf32>
    %c0_1 = arith.constant 0 : index
    %c0_2 = arith.constant 0 : index
    %2 = vector.load %arg2[%c0_1, %c0_2] : memref<8x256xbf16, #tpu.memory_space<vmem>>, vector<8x256xbf16>
    %3 = arith.extf %2 : vector<8x256xbf16> to vector<8x256xf32>
    %c0_3 = arith.constant 0 : index
    %c0_4 = arith.constant 0 : index
    %4 = vector.load %arg3[%c0_3, %c0_4] : memref<32x16xf32, #tpu.memory_space<vmem>>, vector<32x16xf32>
    %cst = arith.constant dense<0.000000e+00> : vector<32x256xf32>
    %5 = tpu.matmul %4, %1, %cst {dimension_numbers = #tpu.dot_dimension_numbers<[1], [0], [0], [1], [0, 0, 1, 1], [], []>} : vector<32x16xf32>, vector<16x256xf32>, vector<32x256xf32> -> vector<32x256xf32>
    %c0_5 = arith.constant 0 : index
    %c0_6 = arith.constant 0 : index
    %6 = vector.load %arg4[%c0_5, %c0_6] : memref<32x1xf32, #tpu.memory_space<vmem>>, vector<32x1xf32>
    %7 = vector.broadcast %6 : vector<32x1xf32> to vector<32x256xf32>
    %8 = arith.addf %5, %7 : vector<32x256xf32>
    %cst_7 = arith.constant 0.000000e+00 : f32
    %9 = vector.broadcast %cst_7 : f32 to vector<32x256xf32>
    %10 = arith.maximumf %8, %9 : vector<32x256xf32>
    %c0_8 = arith.constant 0 : index
    %c0_9 = arith.constant 0 : index
    %11 = vector.load %arg5[%c0_8, %c0_9] : memref<32x32xf32, #tpu.memory_space<vmem>>, vector<32x32xf32>
    %cst_10 = arith.constant dense<0.000000e+00> : vector<32x256xf32>
    %12 = tpu.matmul %11, %10, %cst_10 {dimension_numbers = #tpu.dot_dimension_numbers<[1], [0], [0], [1], [0, 0, 1, 1], [], []>} : vector<32x32xf32>, vector<32x256xf32>, vector<32x256xf32> -> vector<32x256xf32>
    %c0_11 = arith.constant 0 : index
    %c0_12 = arith.constant 0 : index
    %13 = vector.load %arg6[%c0_11, %c0_12] : memref<32x1xf32, #tpu.memory_space<vmem>>, vector<32x1xf32>
    %14 = vector.broadcast %13 : vector<32x1xf32> to vector<32x256xf32>
    %15 = arith.addf %12, %14 : vector<32x256xf32>
    %c0_13 = arith.constant 0 : index
    %c0_14 = arith.constant 0 : index
    %16 = vector.load %arg7[%c0_13, %c0_14] : memref<32x8xf32, #tpu.memory_space<vmem>>, vector<32x8xf32>
    %cst_15 = arith.constant dense<0.000000e+00> : vector<32x256xf32>
    %17 = tpu.matmul %16, %3, %cst_15 {dimension_numbers = #tpu.dot_dimension_numbers<[1], [0], [0], [1], [0, 0, 1, 1], [], []>} : vector<32x8xf32>, vector<8x256xf32>, vector<32x256xf32> -> vector<32x256xf32>
    %c0_16 = arith.constant 0 : index
    %c0_17 = arith.constant 0 : index
    %18 = vector.load %arg8[%c0_16, %c0_17] : memref<32x1xf32, #tpu.memory_space<vmem>>, vector<32x1xf32>
    %19 = vector.broadcast %18 : vector<32x1xf32> to vector<32x256xf32>
    %20 = arith.addf %17, %19 : vector<32x256xf32>
    %cst_18 = arith.constant 0.000000e+00 : f32
    %21 = vector.broadcast %cst_18 : f32 to vector<32x256xf32>
    %22 = arith.maximumf %20, %21 : vector<32x256xf32>
    %c0_19 = arith.constant 0 : index
    %c0_20 = arith.constant 0 : index
    %23 = vector.load %arg9[%c0_19, %c0_20] : memref<16x32xf32, #tpu.memory_space<vmem>>, vector<16x32xf32>
    %cst_21 = arith.constant dense<0.000000e+00> : vector<16x256xf32>
    %24 = tpu.matmul %23, %22, %cst_21 {dimension_numbers = #tpu.dot_dimension_numbers<[1], [0], [0], [1], [0, 0, 1, 1], [], []>} : vector<16x32xf32>, vector<32x256xf32>, vector<16x256xf32> -> vector<16x256xf32>
    %c0_22 = arith.constant 0 : index
    %c0_23 = arith.constant 0 : index
    %25 = vector.load %arg10[%c0_22, %c0_23] : memref<16x1xf32, #tpu.memory_space<vmem>>, vector<16x1xf32>
    %26 = vector.broadcast %25 : vector<16x1xf32> to vector<16x256xf32>
    %27 = arith.addf %24, %26 : vector<16x256xf32>
    %c0_24 = arith.constant 0 : index
    %c0_25 = arith.constant 0 : index
    %28 = vector.load %arg11[%c0_24, %c0_25] : memref<32x32xf32, #tpu.memory_space<vmem>>, vector<32x32xf32>
    %cst_26 = arith.constant dense<0.000000e+00> : vector<32x256xf32>
    %29 = tpu.matmul %28, %15, %cst_26 {dimension_numbers = #tpu.dot_dimension_numbers<[1], [0], [0], [1], [0, 0, 1, 1], [], []>} : vector<32x32xf32>, vector<32x256xf32>, vector<32x256xf32> -> vector<32x256xf32>
    %c0_27 = arith.constant 0 : index
    %c0_28 = arith.constant 0 : index
    %30 = vector.load %arg12[%c0_27, %c0_28] : memref<32x16xf32, #tpu.memory_space<vmem>>, vector<32x16xf32>
    %cst_29 = arith.constant dense<0.000000e+00> : vector<32x256xf32>
    %31 = tpu.matmul %30, %27, %cst_29 {dimension_numbers = #tpu.dot_dimension_numbers<[1], [0], [0], [1], [0, 0, 1, 1], [], []>} : vector<32x16xf32>, vector<16x256xf32>, vector<32x256xf32> -> vector<32x256xf32>
    %32 = arith.addf %29, %31 : vector<32x256xf32>
    %c0_30 = arith.constant 0 : index
    %c0_31 = arith.constant 0 : index
    %33 = vector.load %arg13[%c0_30, %c0_31] : memref<32x1xf32, #tpu.memory_space<vmem>>, vector<32x1xf32>
    %34 = vector.broadcast %33 : vector<32x1xf32> to vector<32x256xf32>
    %35 = arith.addf %32, %34 : vector<32x256xf32>
    %cst_32 = arith.constant 0.000000e+00 : f32
    %36 = vector.broadcast %cst_32 : f32 to vector<32x256xf32>
    %37 = arith.maximumf %35, %36 : vector<32x256xf32>
    %c0_33 = arith.constant 0 : index
    %c0_34 = arith.constant 0 : index
    %38 = vector.load %arg14[%c0_33, %c0_34] : memref<1x32xf32, #tpu.memory_space<vmem>>, vector<1x32xf32>
    %cst_35 = arith.constant dense<0.000000e+00> : vector<1x256xf32>
    %39 = tpu.matmul %38, %37, %cst_35 {dimension_numbers = #tpu.dot_dimension_numbers<[1], [0], [0], [1], [0, 0, 1, 1], [], []>} : vector<1x32xf32>, vector<32x256xf32>, vector<1x256xf32> -> vector<1x256xf32>
    %c0_36 = arith.constant 0 : index
    %c0_37 = arith.constant 0 : index
    %40 = vector.load %arg15[%c0_36, %c0_37] : memref<1x1xf32, #tpu.memory_space<vmem>>, vector<1x1xf32>
    %41 = vector.broadcast %40 : vector<1x1xf32> to vector<1x256xf32>
    %42 = arith.addf %39, %41 : vector<1x256xf32>
    %c0_38 = arith.constant 0 : index
    %c0_39 = arith.constant 0 : index
    %43 = vector.load %arg16[%c0_38, %c0_39] : memref<1x256xf32, #tpu.memory_space<vmem>>, vector<1x256xf32>
    tpu.vector_store %arg16[%c0_38, %c0_39], %42 {strides = array<i32>} : memref<1x256xf32, #tpu.memory_space<vmem>>, vector<1x256xf32>,
    return
  }
  func.func @transform_0(%arg0: i32) -> (i32, i32) {
    %c0_i32 = arith.constant 0 : i32
    %c0_i32_0 = arith.constant 0 : i32
    return %c0_i32, %arg0 : i32, i32
  }
  func.func @transform_1(%arg0: i32) -> (i32, i32) {
    %c0_i32 = arith.constant 0 : i32
    %c0_i32_0 = arith.constant 0 : i32
    return %c0_i32, %arg0 : i32, i32
  }
  func.func @transform_2(%arg0: i32) -> (i32, i32) {
    %c0_i32 = arith.constant 0 : i32
    %c0_i32_0 = arith.constant 0 : i32
    %c0_i32_1 = arith.constant 0 : i32
    return %c0_i32, %c0_i32_0 : i32, i32
  }
  func.func @transform_3(%arg0: i32) -> (i32, i32) {
    %c0_i32 = arith.constant 0 : i32
    %c0_i32_0 = arith.constant 0 : i32
    %c0_i32_1 = arith.constant 0 : i32
    return %c0_i32, %c0_i32_0 : i32, i32
  }
  func.func @transform_4(%arg0: i32) -> (i32, i32) {
    %c0_i32 = arith.constant 0 : i32
    %c0_i32_0 = arith.constant 0 : i32
    %c0_i32_1 = arith.constant 0 : i32
    return %c0_i32, %c0_i32_0 : i32, i32
  }
  func.func @transform_5(%arg0: i32) -> (i32, i32) {
    %c0_i32 = arith.constant 0 : i32
    %c0_i32_0 = arith.constant 0 : i32
    %c0_i32_1 = arith.constant 0 : i32
    return %c0_i32, %c0_i32_0 : i32, i32
  }
  func.func @transform_6(%arg0: i32) -> (i32, i32) {
    %c0_i32 = arith.constant 0 : i32
    %c0_i32_0 = arith.constant 0 : i32
    %c0_i32_1 = arith.constant 0 : i32
    return %c0_i32, %c0_i32_0 : i32, i32
  }
  func.func @transform_7(%arg0: i32) -> (i32, i32) {
    %c0_i32 = arith.constant 0 : i32
    %c0_i32_0 = arith.constant 0 : i32
    %c0_i32_1 = arith.constant 0 : i32
    return %c0_i32, %c0_i32_0 : i32, i32
  }
  func.func @transform_8(%arg0: i32) -> (i32, i32) {
    %c0_i32 = arith.constant 0 : i32
    %c0_i32_0 = arith.constant 0 : i32
    %c0_i32_1 = arith.constant 0 : i32
    return %c0_i32, %c0_i32_0 : i32, i32
  }
  func.func @transform_9(%arg0: i32) -> (i32, i32) {
    %c0_i32 = arith.constant 0 : i32
    %c0_i32_0 = arith.constant 0 : i32
    %c0_i32_1 = arith.constant 0 : i32
    return %c0_i32, %c0_i32_0 : i32, i32
  }
  func.func @transform_10(%arg0: i32) -> (i32, i32) {
    %c0_i32 = arith.constant 0 : i32
    %c0_i32_0 = arith.constant 0 : i32
    %c0_i32_1 = arith.constant 0 : i32
    return %c0_i32, %c0_i32_0 : i32, i32
  }
  func.func @transform_11(%arg0: i32) -> (i32, i32) {
    %c0_i32 = arith.constant 0 : i32
    %c0_i32_0 = arith.constant 0 : i32
    %c0_i32_1 = arith.constant 0 : i32
    return %c0_i32, %c0_i32_0 : i32, i32
  }
  func.func @transform_12(%arg0: i32) -> (i32, i32) {
    %c0_i32 = arith.constant 0 : i32
    %c0_i32_0 = arith.constant 0 : i32
    %c0_i32_1 = arith.constant 0 : i32
    return %c0_i32, %c0_i32_0 : i32, i32
  }
  func.func @transform_13(%arg0: i32) -> (i32, i32) {
    %c0_i32 = arith.constant 0 : i32
    %c0_i32_0 = arith.constant 0 : i32
    %c0_i32_1 = arith.constant 0 : i32
    return %c0_i32, %c0_i32_0 : i32, i32
  }
  func.func @transform_14(%arg0: i32) -> (i32, i32) {
    %c0_i32 = arith.constant 0 : i32
    %c0_i32_0 = arith.constant 0 : i32
    %c0_i32_1 = arith.constant 0 : i32
    return %c0_i32, %c0_i32_0 : i32, i32
  }
  func.func @transform_15(%arg0: i32) -> (i32, i32) {
    %c0_i32 = arith.constant 0 : i32
    %c0_i32_0 = arith.constant 0 : i32
    return %c0_i32, %arg0 : i32, i32
  }
}

</mosaic_0001>

<llo_original>
// kernel: conditional_scalar_estimator_forward.1
$region0: #{conditional_scalar_estimator_forward.1}
  #allocation0 [shape = 'u32[]', space=smem, size = 0x4, offset = 0x4, fixed_abs, tag = 'smem constant byte address 0x4 - core index']
  #allocation1 [shape = 'u32[144,128]{1,0:T(1,128)}', space=vmem, size = 0x12000, scoped, tag = 'internal scratch']
  #allocation2 [shape = 'f32[1,1]{1,0:T(1,128)S(1)}', space=vmem, size = 0x200, scoped, tag = 'scoped memory for conditional_scalar_estimator_forward.1']
  %s0 = inlined_call_operand.vmem [shape: bf16[16,512], index: 0, kind: input, shape index: {}]
  %s1 = inlined_call_operand.vmem [shape: bf16[8,512], index: 1, kind: input, shape index: {}]
  %s2 = inlined_call_operand.vmem [shape: f32[32,16], index: 2, kind: input, shape index: {}]
  %s3 = inlined_call_operand.vmem [shape: f32[32,1], index: 3, kind: input, shape index: {}]
  %s4 = inlined_call_operand.vmem [shape: f32[32,32], index: 4, kind: input, shape index: {}]
  %s5 = inlined_call_operand.vmem [shape: f32[32,1], index: 5, kind: input, shape index: {}]
  %s6 = inlined_call_operand.vmem [shape: f32[32,8], index: 6, kind: input, shape index: {}]
  %s7 = inlined_call_operand.vmem [shape: f32[32,1], index: 7, kind: input, shape index: {}]
  %s8 = inlined_call_operand.vmem [shape: f32[16,32], index: 8, kind: input, shape index: {}]
  %s9 = inlined_call_operand.vmem [shape: f32[16,1], index: 9, kind: input, shape index: {}]
  %s10 = inlined_call_operand.vmem [shape: f32[32,32], index: 10, kind: input, shape index: {}]
  %s11 = inlined_call_operand.vmem [shape: f32[32,16], index: 11, kind: input, shape index: {}]
  %s12 = inlined_call_operand.vmem [shape: f32[32,1], index: 12, kind: input, shape index: {}]
  %s13 = inlined_call_operand.vmem [shape: f32[1,32], index: 13, kind: input, shape index: {}]
  %s14 = inlined_call_operand.<no memory space> [shape: f32[1,1], index: 14, kind: input, shape index: {}]
  %s15 = inlined_call_operand.hbm [shape: f32[1,512], index: 15, kind: output, shape index: {}]
  %s16 = sld [smem:[#allocation0]]
  $region131: #{conditional_scalar_estimator_forward.1} parent=0
    _
  %s18 = ssub.s32 1, %s16
  %s19 = scalar_select 0, %s18, %s16
  %v20 = vstv %s14
  %21 = vst [vmem:[#allocation2] sm:$0x1] %v20
  $region1: #{conditional_scalar_estimator_forward.1} parent=0
    #allocation3 [shape = 'u8[16384]{0}', space=vmem, size = 0x4000, scoped, tag = 'input window, operand 0']
    #allocation4 [shape = 'u8[2048]{0}', space=vmem, size = 0x800, scoped, tag = 'output window, operand 0']
    #allocation5 [shape = 's32[2]{0}', space=sflag, size = 0x8, scoped, tag = 'scoped memory for conditional_scalar_estimator_forward.1']
    %22 = vsyncpa [#allocation5], 0
    %s23 = scalar_lea.sflag [#allocation5], 1
    %24 = vsyncpa %s23, 0
    loop: start=0, step=1, limit=4
    $region2: #{conditional_scalar_estimator_forward.1} parent=1 // loop_pre_header
      _
    $region3: #{conditional_scalar_estimator_forward.1} parent=1 // loop_header
      %s26 = sphi 0, %s30
      %p27 = scmp.ge.s32.totalorder %s26, 4
      %s36 = sphi 0, %s38
      %s39 = sphi 0, %s36
      %s40 = sphi 0, %s39
      %s56 = sphi 0, %s40
      %s62 = sphi 0, %s64
      %s65 = sphi 0, %s62
      %s66 = sphi 0, %s65
      %s82 = sphi 0, %s66
      %s86 = sphi 0, %s86
      %s88 = sphi 0, %s86
      %s89 = sphi 0, %s88
      %s103 = sphi 0, %s89
      %s107 = sphi 0, %s107
      %s109 = sphi 0, %s107
      %s110 = sphi 0, %s109
      %s124 = sphi 0, %s110
      %s128 = sphi 0, %s128
      %s130 = sphi 0, %s128
      %s131 = sphi 0, %s130
      %s145 = sphi 0, %s131
      %s149 = sphi 0, %s149
      %s151 = sphi 0, %s149
      %s152 = sphi 0, %s151
      %s166 = sphi 0, %s152
      %s170 = sphi 0, %s170
      %s172 = sphi 0, %s170
      %s173 = sphi 0, %s172
      %s187 = sphi 0, %s173
      %s191 = sphi 0, %s191
      %s193 = sphi 0, %s191
      %s194 = sphi 0, %s193
      %s208 = sphi 0, %s194
      %s212 = sphi 0, %s212
      %s214 = sphi 0, %s212
      %s215 = sphi 0, %s214
      %s229 = sphi 0, %s215
      %s233 = sphi 0, %s233
      %s235 = sphi 0, %s233
      %s236 = sphi 0, %s235
      %s250 = sphi 0, %s236
      %s254 = sphi 0, %s254
      %s256 = sphi 0, %s254
      %s257 = sphi 0, %s256
      %s271 = sphi 0, %s257
      %s275 = sphi 0, %s275
      %s277 = sphi 0, %s275
      %s278 = sphi 0, %s277
      %s292 = sphi 0, %s278
      %s296 = sphi 0, %s296
      %s298 = sphi 0, %s296
      %s299 = sphi 0, %s298
      %s313 = sphi 0, %s299
      %s317 = sphi 0, %s317
      %s319 = sphi 0, %s317
      %s320 = sphi 0, %s319
      %s334 = sphi 0, %s320
      %s338 = sphi 0, %s338
      %s340 = sphi 0, %s338
      %s341 = sphi 0, %s340
      %s355 = sphi 0, %s341
      %s361 = sphi 0, %s363
      %s364 = sphi 0, %s361
      %s365 = sphi 0, %s364
      %s381 = sphi 0, %s365
    $region4: #{conditional_scalar_estimator_forward.1} parent=1 // loop_header_branch
      %29 = sbr.rel (%p27) target = $region8
    $region5: #{conditional_scalar_estimator_forward.1} parent=1 // loop_body
      %s31 = ssub.s32 %s26, 1
      %s32 = ssub.s32 %s26, 2
      %s33 = sadd.s32 %s26, 1
      %s34 = ssub.s32 %s26, %s33
      %p35 = scmp.eq.s32.totalorder %s34, 0
      %s37 = sadd.s32 %s36, 1
      %s38 = scalar_select %p35, %s36, %s37
      %p41 = pneg %p35
      %p42 = scmp.eq.s32.totalorder %s26, 1
      %p43 = por %p41, %p42
      %p44 = scmp.ne.s32.totalorder %s36, %s39
      %p45 = scmp.eq.s32.totalorder %s26, 0
      %p46 = por %p44, %p45
      %p47 = scmp.ne.s32.totalorder %s36, %s39
      %p48 = scmp.eq.s32.totalorder %s31, 1
      %p49 = por %p47, %p48
      %p50 = scmp.ne.s32.totalorder %s39, %s40
      %p51 = scmp.eq.s32.totalorder %s31, 0
      %p52 = por %p50, %p51
      %p53 = scmp.ne.s32.totalorder %s39, %s40
      %p54 = scmp.eq.s32.totalorder %s32, 1
      %p55 = por %p53, %p54
      %p57 = scmp.ne.s32.totalorder %s40, %s56
      %p58 = scmp.eq.s32.totalorder %s32, 0
      %p59 = por %p57, %p58
      %s60 = ssub.s32 %s26, %s33
      %p61 = scmp.eq.s32.totalorder %s60, 0
      %s63 = sadd.s32 %s62, 1
      %s64 = scalar_select %p61, %s62, %s63
      %p67 = pneg %p61
      %p68 = scmp.eq.s32.totalorder %s26, 1
      %p69 = por %p67, %p68
      %p70 = scmp.ne.s32.totalorder %s62, %s65
      %p71 = scmp.eq.s32.totalorder %s26, 0
      %p72 = por %p70, %p71
      %p73 = scmp.ne.s32.totalorder %s62, %s65
      %p74 = scmp.eq.s32.totalorder %s31, 1
      %p75 = por %p73, %p74
      %p76 = scmp.ne.s32.totalorder %s65, %s66
      %p77 = scmp.eq.s32.totalorder %s31, 0
      %p78 = por %p76, %p77
      %p79 = scmp.ne.s32.totalorder %s65, %s66
      %p80 = scmp.eq.s32.totalorder %s32, 1
      %p81 = por %p79, %p80
      %p83 = scmp.ne.s32.totalorder %s66, %s82
      %p84 = scmp.eq.s32.totalorder %s32, 0
      %p85 = por %p83, %p84
      %s87 = sadd.s32 %s86, 1
      %p90 = scmp.eq.s32.totalorder %s26, 1
      %p91 = scmp.ne.s32.totalorder %s86, %s88
      %p92 = scmp.eq.s32.totalorder %s26, 0
      %p93 = por %p91, %p92
      %p94 = scmp.ne.s32.totalorder %s86, %s88
      %p95 = scmp.eq.s32.totalorder %s31, 1
      %p96 = por %p94, %p95
      %p97 = scmp.ne.s32.totalorder %s88, %s89
      %p98 = scmp.eq.s32.totalorder %s31, 0
      %p99 = por %p97, %p98
      %p100 = scmp.ne.s32.totalorder %s88, %s89
      %p101 = scmp.eq.s32.totalorder %s32, 1
      %p102 = por %p100, %p101
      %p104 = scmp.ne.s32.totalorder %s89, %s103
      %p105 = scmp.eq.s32.totalorder %s32, 0
      %p106 = por %p104, %p105
      %s108 = sadd.s32 %s107, 1
      %p111 = scmp.eq.s32.totalorder %s26, 1
      %p112 = scmp.ne.s32.totalorder %s107, %s109
      %p113 = scmp.eq.s32.totalorder %s26, 0
      %p114 = por %p112, %p113
      %p115 = scmp.ne.s32.totalorder %s107, %s109
      %p116 = scmp.eq.s32.totalorder %s31, 1
      %p117 = por %p115, %p116
      %p118 = scmp.ne.s32.totalorder %s109, %s110
      %p119 = scmp.eq.s32.totalorder %s31, 0
      %p120 = por %p118, %p119
      %p121 = scmp.ne.s32.totalorder %s109, %s110
      %p122 = scmp.eq.s32.totalorder %s32, 1
      %p123 = por %p121, %p122
      %p125 = scmp.ne.s32.totalorder %s110, %s124
      %p126 = scmp.eq.s32.totalorder %s32, 0
      %p127 = por %p125, %p126
      %s129 = sadd.s32 %s128, 1
      %p132 = scmp.eq.s32.totalorder %s26, 1
      %p133 = scmp.ne.s32.totalorder %s128, %s130
      %p134 = scmp.eq.s32.totalorder %s26, 0
      %p135 = por %p133, %p134
      %p136 = scmp.ne.s32.totalorder %s128, %s130
      %p137 = scmp.eq.s32.totalorder %s31, 1
      %p138 = por %p136, %p137
      %p139 = scmp.ne.s32.totalorder %s130, %s131
      %p140 = scmp.eq.s32.totalorder %s31, 0
      %p141 = por %p139, %p140
      %p142 = scmp.ne.s32.totalorder %s130, %s131
      %p143 = scmp.eq.s32.totalorder %s32, 1
      %p144 = por %p142, %p143
      %p146 = scmp.ne.s32.totalorder %s131, %s145
      %p147 = scmp.eq.s32.totalorder %s32, 0
      %p148 = por %p146, %p147
      %s150 = sadd.s32 %s149, 1
      %p153 = scmp.eq.s32.totalorder %s26, 1
      %p154 = scmp.ne.s32.totalorder %s149, %s151
      %p155 = scmp.eq.s32.totalorder %s26, 0
      %p156 = por %p154, %p155
      %p157 = scmp.ne.s32.totalorder %s149, %s151
      %p158 = scmp.eq.s32.totalorder %s31, 1
      %p159 = por %p157, %p158
      %p160 = scmp.ne.s32.totalorder %s151, %s152
      %p161 = scmp.eq.s32.totalorder %s31, 0
      %p162 = por %p160, %p161
      %p163 = scmp.ne.s32.totalorder %s151, %s152
      %p164 = scmp.eq.s32.totalorder %s32, 1
      %p165 = por %p163, %p164
      %p167 = scmp.ne.s32.totalorder %s152, %s166
      %p168 = scmp.eq.s32.totalorder %s32, 0
      %p169 = por %p167, %p168
      %s171 = sadd.s32 %s170, 1
      %p174 = scmp.eq.s32.totalorder %s26, 1
      %p175 = scmp.ne.s32.totalorder %s170, %s172
      %p176 = scmp.eq.s32.totalorder %s26, 0
      %p177 = por %p175, %p176
      %p178 = scmp.ne.s32.totalorder %s170, %s172
      %p179 = scmp.eq.s32.totalorder %s31, 1
      %p180 = por %p178, %p179
      %p181 = scmp.ne.s32.totalorder %s172, %s173
      %p182 = scmp.eq.s32.totalorder %s31, 0
      %p183 = por %p181, %p182
      %p184 = scmp.ne.s32.totalorder %s172, %s173
      %p185 = scmp.eq.s32.totalorder %s32, 1
      %p186 = por %p184, %p185
      %p188 = scmp.ne.s32.totalorder %s173, %s187
      %p189 = scmp.eq.s32.totalorder %s32, 0
      %p190 = por %p188, %p189
      %s192 = sadd.s32 %s191, 1
      %p195 = scmp.eq.s32.totalorder %s26, 1
      %p196 = scmp.ne.s32.totalorder %s191, %s193
      %p197 = scmp.eq.s32.totalorder %s26, 0
      %p198 = por %p196, %p197
      %p199 = scmp.ne.s32.totalorder %s191, %s193
      %p200 = scmp.eq.s32.totalorder %s31, 1
      %p201 = por %p199, %p200
      %p202 = scmp.ne.s32.totalorder %s193, %s194
      %p203 = scmp.eq.s32.totalorder %s31, 0
      %p204 = por %p202, %p203
      %p205 = scmp.ne.s32.totalorder %s193, %s194
      %p206 = scmp.eq.s32.totalorder %s32, 1
      %p207 = por %p205, %p206
      %p209 = scmp.ne.s32.totalorder %s194, %s208
      %p210 = scmp.eq.s32.totalorder %s32, 0
      %p211 = por %p209, %p210
      %s213 = sadd.s32 %s212, 1
      %p216 = scmp.eq.s32.totalorder %s26, 1
      %p217 = scmp.ne.s32.totalorder %s212, %s214
      %p218 = scmp.eq.s32.totalorder %s26, 0
      %p219 = por %p217, %p218
      %p220 = scmp.ne.s32.totalorder %s212, %s214
      %p221 = scmp.eq.s32.totalorder %s31, 1
      %p222 = por %p220, %p221
      %p223 = scmp.ne.s32.totalorder %s214, %s215
      %p224 = scmp.eq.s32.totalorder %s31, 0
      %p225 = por %p223, %p224
      %p226 = scmp.ne.s32.totalorder %s214, %s215
      %p227 = scmp.eq.s32.totalorder %s32, 1
      %p228 = por %p226, %p227
      %p230 = scmp.ne.s32.totalorder %s215, %s229
      %p231 = scmp.eq.s32.totalorder %s32, 0
      %p232 = por %p230, %p231
      %s234 = sadd.s32 %s233, 1
      %p237 = scmp.eq.s32.totalorder %s26, 1
      %p238 = scmp.ne.s32.totalorder %s233, %s235
      %p239 = scmp.eq.s32.totalorder %s26, 0
      %p240 = por %p238, %p239
      %p241 = scmp.ne.s32.totalorder %s233, %s235
      %p242 = scmp.eq.s32.totalorder %s31, 1
      %p243 = por %p241, %p242
      %p244 = scmp.ne.s32.totalorder %s235, %s236
      %p245 = scmp.eq.s32.totalorder %s31, 0
      %p246 = por %p244, %p245
      %p247 = scmp.ne.s32.totalorder %s235, %s236
      %p248 = scmp.eq.s32.totalorder %s32, 1
      %p249 = por %p247, %p248
      %p251 = scmp.ne.s32.totalorder %s236, %s250
      %p252 = scmp.eq.s32.totalorder %s32, 0
      %p253 = por %p251, %p252
      %s255 = sadd.s32 %s254, 1
      %p258 = scmp.eq.s32.totalorder %s26, 1
      %p259 = scmp.ne.s32.totalorder %s254, %s256
      %p260 = scmp.eq.s32.totalorder %s26, 0
      %p261 = por %p259, %p260
      %p262 = scmp.ne.s32.totalorder %s254, %s256
      %p263 = scmp.eq.s32.totalorder %s31, 1
      %p264 = por %p262, %p263
      %p265 = scmp.ne.s32.totalorder %s256, %s257
      %p266 = scmp.eq.s32.totalorder %s31, 0
      %p267 = por %p265, %p266
      %p268 = scmp.ne.s32.totalorder %s256, %s257
      %p269 = scmp.eq.s32.totalorder %s32, 1
      %p270 = por %p268, %p269
      %p272 = scmp.ne.s32.totalorder %s257, %s271
      %p273 = scmp.eq.s32.totalorder %s32, 0
      %p274 = por %p272, %p273
      %s276 = sadd.s32 %s275, 1
      %p279 = scmp.eq.s32.totalorder %s26, 1
      %p280 = scmp.ne.s32.totalorder %s275, %s277
      %p281 = scmp.eq.s32.totalorder %s26, 0
      %p282 = por %p280, %p281
      %p283 = scmp.ne.s32.totalorder %s275, %s277
      %p284 = scmp.eq.s32.totalorder %s31, 1
      %p285 = por %p283, %p284
      %p286 = scmp.ne.s32.totalorder %s277, %s278
      %p287 = scmp.eq.s32.totalorder %s31, 0
      %p288 = por %p286, %p287
      %p289 = scmp.ne.s32.totalorder %s277, %s278
      %p290 = scmp.eq.s32.totalorder %s32, 1
      %p291 = por %p289, %p290
      %p293 = scmp.ne.s32.totalorder %s278, %s292
      %p294 = scmp.eq.s32.totalorder %s32, 0
      %p295 = por %p293, %p294
      %s297 = sadd.s32 %s296, 1
      %p300 = scmp.eq.s32.totalorder %s26, 1
      %p301 = scmp.ne.s32.totalorder %s296, %s298
      %p302 = scmp.eq.s32.totalorder %s26, 0
      %p303 = por %p301, %p302
      %p304 = scmp.ne.s32.totalorder %s296, %s298
      %p305 = scmp.eq.s32.totalorder %s31, 1
      %p306 = por %p304, %p305
      %p307 = scmp.ne.s32.totalorder %s298, %s299
      %p308 = scmp.eq.s32.totalorder %s31, 0
      %p309 = por %p307, %p308
      %p310 = scmp.ne.s32.totalorder %s298, %s299
      %p311 = scmp.eq.s32.totalorder %s32, 1
      %p312 = por %p310, %p311
      %p314 = scmp.ne.s32.totalorder %s299, %s313
      %p315 = scmp.eq.s32.totalorder %s32, 0
      %p316 = por %p314, %p315
      %s318 = sadd.s32 %s317, 1
      %p321 = scmp.eq.s32.totalorder %s26, 1
      %p322 = scmp.ne.s32.totalorder %s317, %s319
      %p323 = scmp.eq.s32.totalorder %s26, 0
      %p324 = por %p322, %p323
      %p325 = scmp.ne.s32.totalorder %s317, %s319
      %p326 = scmp.eq.s32.totalorder %s31, 1
      %p327 = por %p325, %p326
      %p328 = scmp.ne.s32.totalorder %s319, %s320
      %p329 = scmp.eq.s32.totalorder %s31, 0
      %p330 = por %p328, %p329
      %p331 = scmp.ne.s32.totalorder %s319, %s320
      %p332 = scmp.eq.s32.totalorder %s32, 1
      %p333 = por %p331, %p332
      %p335 = scmp.ne.s32.totalorder %s320, %s334
      %p336 = scmp.eq.s32.totalorder %s32, 0
      %p337 = por %p335, %p336
      %s339 = sadd.s32 %s338, 1
      %p342 = scmp.eq.s32.totalorder %s26, 1
      %p343 = scmp.ne.s32.totalorder %s338, %s340
      %p344 = scmp.eq.s32.totalorder %s26, 0
      %p345 = por %p343, %p344
      %p346 = scmp.ne.s32.totalorder %s338, %s340
      %p347 = scmp.eq.s32.totalorder %s31, 1
      %p348 = por %p346, %p347
      %p349 = scmp.ne.s32.totalorder %s340, %s341
      %p350 = scmp.eq.s32.totalorder %s31, 0
      %p351 = por %p349, %p350
      %p352 = scmp.ne.s32.totalorder %s340, %s341
      %p353 = scmp.eq.s32.totalorder %s32, 1
      %p354 = por %p352, %p353
      %p356 = scmp.ne.s32.totalorder %s341, %s355
      %p357 = scmp.eq.s32.totalorder %s32, 0
      %p358 = por %p356, %p357
      %s359 = ssub.s32 %s26, %s33
      %p360 = scmp.eq.s32.totalorder %s359, 0
      %s362 = sadd.s32 %s361, 1
      %s363 = scalar_select %p360, %s361, %s362
      %p366 = pneg %p360
      %p367 = scmp.eq.s32.totalorder %s26, 1
      %p368 = por %p366, %p367
      %p369 = scmp.ne.s32.totalorder %s361, %s364
      %p370 = scmp.eq.s32.totalorder %s26, 0
      %p371 = por %p369, %p370
      %p372 = scmp.ne.s32.totalorder %s361, %s364
      %p373 = scmp.eq.s32.totalorder %s31, 1
      %p374 = por %p372, %p373
      %p375 = scmp.ne.s32.totalorder %s364, %s365
      %p376 = scmp.eq.s32.totalorder %s31, 0
      %p377 = por %p375, %p376
      %p378 = scmp.ne.s32.totalorder %s364, %s365
      %p379 = scmp.eq.s32.totalorder %s32, 1
      %p380 = por %p378, %p379
      %p382 = scmp.ne.s32.totalorder %s365, %s381
      %p383 = scmp.eq.s32.totalorder %s32, 0
      %p384 = por %p382, %p383
      %p385 = scmp.le.s32.totalorder 1, %s26
      %p386 = scmp.lt.s32.totalorder %s26, 3
      %p387 = pnand %p385, %p386
      %p388 = pneg %p387
      // Predicated region
      $region9: #{conditional_scalar_estimator_forward.1} parent=5 // pred_check
        _
      $region10: #{conditional_scalar_estimator_forward.1} parent=5 // pred_check_branch
        %390 = sbr.rel (%p387) target = $region12
      $region11: #{conditional_scalar_estimator_forward.1} parent=5 // pred_region
        %s391 = ssub.s32 %s26, 1
        // Predicated region
        $region13: #{conditional_scalar_estimator_forward.1} parent=11 // pred_check
          %p392 = pneg %p99
        $region14: #{conditional_scalar_estimator_forward.1} parent=11 // pred_check_branch
          %394 = sbr.rel (%p392) target = $region16
        $region15: #{conditional_scalar_estimator_forward.1} parent=11 // pred_region
          _
        $region16: #{conditional_scalar_estimator_forward.1} parent=11 // pred_fallthru
          _
        // Predicated region
        $region17: #{conditional_scalar_estimator_forward.1} parent=11 // pred_check
          %p395 = pneg %p120
        $region18: #{conditional_scalar_estimator_forward.1} parent=11 // pred_check_branch
          %397 = sbr.rel (%p395) target = $region20
        $region19: #{conditional_scalar_estimator_forward.1} parent=11 // pred_region
          _
        $region20: #{conditional_scalar_estimator_forward.1} parent=11 // pred_fallthru
          _
        // Predicated region
        $region21: #{conditional_scalar_estimator_forward.1} parent=11 // pred_check
          %p398 = pneg %p141
        $region22: #{conditional_scalar_estimator_forward.1} parent=11 // pred_check_branch
          %400 = sbr.rel (%p398) target = $region24
        $region23: #{conditional_scalar_estimator_forward.1} parent=11 // pred_region
          _
        $region24: #{conditional_scalar_estimator_forward.1} parent=11 // pred_fallthru
          _
        // Predicated region
        $region25: #{conditional_scalar_estimator_forward.1} parent=11 // pred_check
          %p401 = pneg %p162
        $region26: #{conditional_scalar_estimator_forward.1} parent=11 // pred_check_branch
          %403 = sbr.rel (%p401) target = $region28
        $region27: #{conditional_scalar_estimator_forward.1} parent=11 // pred_region
          _
        $region28: #{conditional_scalar_estimator_forward.1} parent=11 // pred_fallthru
          _
        // Predicated region
        $region29: #{conditional_scalar_estimator_forward.1} parent=11 // pred_check
          %p404 = pneg %p183
        $region30: #{conditional_scalar_estimator_forward.1} parent=11 // pred_check_branch
          %406 = sbr.rel (%p404) target = $region32
        $region31: #{conditional_scalar_estimator_forward.1} parent=11 // pred_region
          _
        $region32: #{conditional_scalar_estimator_forward.1} parent=11 // pred_fallthru
          _
        // Predicated region
        $region33: #{conditional_scalar_estimator_forward.1} parent=11 // pred_check
          %p407 = pneg %p204
        $region34: #{conditional_scalar_estimator_forward.1} parent=11 // pred_check_branch
          %409 = sbr.rel (%p407) target = $region36
        $region35: #{conditional_scalar_estimator_forward.1} parent=11 // pred_region
          _
        $region36: #{conditional_scalar_estimator_forward.1} parent=11 // pred_fallthru
          _
        // Predicated region
        $region37: #{conditional_scalar_estimator_forward.1} parent=11 // pred_check
          %p410 = pneg %p225
        $region38: #{conditional_scalar_estimator_forward.1} parent=11 // pred_check_branch
          %412 = sbr.rel (%p410) target = $region40
        $region39: #{conditional_scalar_estimator_forward.1} parent=11 // pred_region
          _
        $region40: #{conditional_scalar_estimator_forward.1} parent=11 // pred_fallthru
          _
        // Predicated region
        $region41: #{conditional_scalar_estimator_forward.1} parent=11 // pred_check
          %p413 = pneg %p246
        $region42: #{conditional_scalar_estimator_forward.1} parent=11 // pred_check_branch
          %415 = sbr.rel (%p413) target = $region44
        $region43: #{conditional_scalar_estimator_forward.1} parent=11 // pred_region
          _
        $region44: #{conditional_scalar_estimator_forward.1} parent=11 // pred_fallthru
          _
        // Predicated region
        $region45: #{conditional_scalar_estimator_forward.1} parent=11 // pred_check
          %p416 = pneg %p267
        $region46: #{conditional_scalar_estimator_forward.1} parent=11 // pred_check_branch
          %418 = sbr.rel (%p416) target = $region48
        $region47: #{conditional_scalar_estimator_forward.1} parent=11 // pred_region
          _
        $region48: #{conditional_scalar_estimator_forward.1} parent=11 // pred_fallthru
          _
        // Predicated region
        $region49: #{conditional_scalar_estimator_forward.1} parent=11 // pred_check
          %p419 = pneg %p288
        $region50: #{conditional_scalar_estimator_forward.1} parent=11 // pred_check_branch
          %421 = sbr.rel (%p419) target = $region52
        $region51: #{conditional_scalar_estimator_forward.1} parent=11 // pred_region
          _
        $region52: #{conditional_scalar_estimator_forward.1} parent=11 // pred_fallthru
          _
        // Predicated region
        $region53: #{conditional_scalar_estimator_forward.1} parent=11 // pred_check
          %p422 = pneg %p309
        $region54: #{conditional_scalar_estimator_forward.1} parent=11 // pred_check_branch
          %424 = sbr.rel (%p422) target = $region56
        $region55: #{conditional_scalar_estimator_forward.1} parent=11 // pred_region
          _
        $region56: #{conditional_scalar_estimator_forward.1} parent=11 // pred_fallthru
          _
        // Predicated region
        $region57: #{conditional_scalar_estimator_forward.1} parent=11 // pred_check
          %p425 = pneg %p330
        $region58: #{conditional_scalar_estimator_forward.1} parent=11 // pred_check_branch
          %427 = sbr.rel (%p425) target = $region60
        $region59: #{conditional_scalar_estimator_forward.1} parent=11 // pred_region
          _
        $region60: #{conditional_scalar_estimator_forward.1} parent=11 // pred_fallthru
          _
        // Predicated region
        $region61: #{conditional_scalar_estimator_forward.1} parent=11 // pred_check
          %p428 = pneg %p351
        $region62: #{conditional_scalar_estimator_forward.1} parent=11 // pred_check_branch
          %430 = sbr.rel (%p428) target = $region64
        $region63: #{conditional_scalar_estimator_forward.1} parent=11 // pred_region
          _
        $region64: #{conditional_scalar_estimator_forward.1} parent=11 // pred_fallthru
          _
      $region12: #{conditional_scalar_estimator_forward.1} parent=5 // pred_fallthru
        _
      %p431 = scmp.lt.s32.totalorder %s26, 2
      // Predicated region
      $region65: #{conditional_scalar_estimator_forward.1} parent=5 // pred_check
        %p432 = pneg %p431
      $region66: #{conditional_scalar_estimator_forward.1} parent=5 // pred_check_branch
        %434 = sbr.rel (%p432) target = $region68
      $region67: #{conditional_scalar_estimator_forward.1} parent=5 // pred_region
        // Predicated region
        $region69: #{conditional_scalar_estimator_forward.1} parent=67 // pred_check
          %p435 = pneg %p46
        $region70: #{conditional_scalar_estimator_forward.1} parent=67 // pred_check_branch
          %437 = sbr.rel (%p435) target = $region72
        $region71: #{conditional_scalar_estimator_forward.1} parent=67 // pred_region
          %s438 = sand.u32 %s36, 1
          %s439 = sand.u32 %s36, 1
          %s440 = smul.addr %s439, 16
          %s441 = scalar_lea.vmem [#allocation3], %s440
          %s442 = smul.u32 2, %s26
          %s443 = smul.addr %s442, 4
          %s444 = scalar_lea.vmem %s0, %s443
          // Predicated region
          $region73: #{conditional_scalar_estimator_forward.1} parent=71 // pred_check
            _
          $region74: #{conditional_scalar_estimator_forward.1} parent=71 // pred_check_branch
            %446 = sbr.rel (0) target = $region76
          $region75: #{conditional_scalar_estimator_forward.1} parent=71 // pred_region
            // Predicated region
            $region77: #{conditional_scalar_estimator_forward.1} parent=75 // pred_check
              _
            $region78: #{conditional_scalar_estimator_forward.1} parent=75 // pred_check_branch
              %448 = sbr.rel (0) target = $region80
            $region79: #{conditional_scalar_estimator_forward.1} parent=75 // pred_region
              // Predicated region
              $region92: #{conditional_scalar_estimator_forward.1} parent=79 // pred_check
                _
              $region93: #{conditional_scalar_estimator_forward.1} parent=79 // pred_check_branch
                %465 = sbr.rel (0) target = $region95
              $region94: #{conditional_scalar_estimator_forward.1} parent=79 // pred_region
                loop: start=0, step=1, limit=1
                $region96: #{conditional_scalar_estimator_forward.1} parent=94 // loop_pre_header
                  _
                $region97: #{conditional_scalar_estimator_forward.1} parent=94 // loop_header
                  %s467 = sphi 0, %s471
                  %p468 = scmp.ge.s32.totalorder %s467, 1
                  %s472 = sphi %s444, %s444
                  %s473 = sphi %s441, %s441
                $region98: #{conditional_scalar_estimator_forward.1} parent=94 // loop_header_branch
                  %470 = sbr.rel (%p468) target = $region102
                $region99: #{conditional_scalar_estimator_forward.1} parent=94 // loop_body
                  %v474 = vld [vmem:[%s472] sm:$0xff]
                  %475 = vst [vmem:[%s473] sm:$0xff] %v474
                  %v476 = vld [vmem:[%s472 + $0x10] sm:$0xff]
                  %477 = vst [vmem:[%s473 + $0x8] sm:$0xff] %v476
                $region100: #{conditional_scalar_estimator_forward.1} parent=94 // loop_footer
                  %s471 = sadd.s32 1, %s467
                $region101: #{conditional_scalar_estimator_forward.1} parent=94 // loop_footer_branch
                  %466 = sbr.rel target = $region97
                $region102: #{conditional_scalar_estimator_forward.1} parent=94 // loop_exit
                  _
              $region95: #{conditional_scalar_estimator_forward.1} parent=79 // pred_fallthru
                _
              // Predicated region
              $region103: #{conditional_scalar_estimator_forward.1} parent=79 // pred_check
                _
              $region104: #{conditional_scalar_estimator_forward.1} parent=79 // pred_check_branch
                %479 = sbr.rel target = $region106
              $region105: #{conditional_scalar_estimator_forward.1} parent=79 // pred_region
                _
              $region106: #{conditional_scalar_estimator_forward.1} parent=79 // pred_fallthru
                _
            $region80: #{conditional_scalar_estimator_forward.1} parent=75 // pred_fallthru
              _
            // Predicated region
            $region81: #{conditional_scalar_estimator_forward.1} parent=75 // pred_check
              _
            $region82: #{conditional_scalar_estimator_forward.1} parent=75 // pred_check_branch
              %450 = sbr.rel target = $region84
            $region83: #{conditional_scalar_estimator_forward.1} parent=75 // pred_region
              loop: start=0, step=1, limit=1
              $region85: #{conditional_scalar_estimator_forward.1} parent=83 // loop_pre_header
                _
              $region86: #{conditional_scalar_estimator_forward.1} parent=83 // loop_header
                %s453 = sphi 0, %s457
                %p454 = scmp.ge.s32.totalorder %s453, 1
                %s458 = sphi %s444, %s444
                %s459 = sphi %s441, %s441
              $region87: #{conditional_scalar_estimator_forward.1} parent=83 // loop_header_branch
                %456 = sbr.rel (%p454) target = $region91
              $region88: #{conditional_scalar_estimator_forward.1} parent=83 // loop_body
                %v460 = vld [vmem:[%s458] sm:$0xff]
                %461 = vst [vmem:[%s459] sm:$0xff] %v460
                %v462 = vld [vmem:[%s458 + $0x10] sm:$0xff]
                %463 = vst [vmem:[%s459 + $0x8] sm:$0xff] %v462
              $region89: #{conditional_scalar_estimator_forward.1} parent=83 // loop_footer
                %s457 = sadd.s32 1, %s453
              $region90: #{conditional_scalar_estimator_forward.1} parent=83 // loop_footer_branch
                %452 = sbr.rel target = $region86
              $region91: #{conditional_scalar_estimator_forward.1} parent=83 // loop_exit
                _
            $region84: #{conditional_scalar_estimator_forward.1} parent=75 // pred_fallthru
              _
          $region76: #{conditional_scalar_estimator_forward.1} parent=71 // pred_fallthru
            _
          %480 = vnop
        $region72: #{conditional_scalar_estimator_forward.1} parent=67 // pred_fallthru
          _
        // Predicated region
        $region107: #{conditional_scalar_estimator_forward.1} parent=67 // pred_check
          %p481 = pneg %p72
        $region108: #{conditional_scalar_estimator_forward.1} parent=67 // pred_check_branch
          %483 = sbr.rel (%p481) target = $region110
        $region109: #{conditional_scalar_estimator_forward.1} parent=67 // pred_region
          %s484 = smul.u32 2, %s26
          %p485 = scmp.lt.s32.totalorder %s484, 3
          %s486 = scalar_select %p485, %s484, 3
          %s487 = smul.addr %s486, 4
          %s488 = scalar_lea.vmem %s1, %s487
          %s489 = smul.u32 2, %s26
        $region110: #{conditional_scalar_estimator_forward.1} parent=67 // pred_fallthru
          _
      $region68: #{conditional_scalar_estimator_forward.1} parent=5 // pred_fallthru
        _
      %p490 = scmp.le.s32.totalorder 1, %s26
      %p491 = scmp.lt.s32.totalorder %s26, 3
      %p492 = pnand %p490, %p491
      %p493 = pneg %p492
      // Predicated region
      $region111: #{conditional_scalar_estimator_forward.1} parent=5 // pred_check
        _
      $region112: #{conditional_scalar_estimator_forward.1} parent=5 // pred_check_branch
        %495 = sbr.rel (%p492) target = $region114
      $region113: #{conditional_scalar_estimator_forward.1} parent=5 // pred_region
        %s496 = ssub.s32 %s26, 1
        %s497 = sand.u32 %s39, 1
        %s498 = sand.u32 %s39, 1
        %s499 = smul.addr %s498, 16
        %s500 = scalar_lea.vmem [#allocation3], %s499
        // Predicated region
        $region115: #{conditional_scalar_estimator_forward.1} parent=113 // pred_check
          %p501 = pneg %p52
        $region116: #{conditional_scalar_estimator_forward.1} parent=113 // pred_check_branch
          %503 = sbr.rel (%p501) target = $region118
        $region117: #{conditional_scalar_estimator_forward.1} parent=113 // pred_region
          _
        $region118: #{conditional_scalar_estimator_forward.1} parent=113 // pred_fallthru
          _
        %s504 = sand.u32 %s39, 1
        %s505 = sand.u32 %s39, 1
        %s506 = smul.addr %s505, 16
        %s507 = scalar_lea.vmem [#allocation3], %s506
        %p508 = pneg %p52
        %p509 = pneg %p49
        %s510 = smul.u32 2, %s31
        %p511 = scmp.lt.s32.totalorder %s510, 3
        %s512 = scalar_select %p511, %s510, 3
        %s513 = smul.addr %s512, 4
        %s514 = scalar_lea.vmem %s1, %s513
        %p515 = pneg %p78
        %p516 = pneg %p75
        %p517 = pneg %p99
        %p518 = pneg %p96
        %p519 = pneg %p120
        %p520 = pneg %p117
        %p521 = pneg %p141
        %p522 = pneg %p138
        %p523 = pneg %p162
        %p524 = pneg %p159
        %p525 = pneg %p183
        %p526 = pneg %p180
        %p527 = pneg %p204
        %p528 = pneg %p201
        %p529 = pneg %p225
        %p530 = pneg %p222
        %p531 = pneg %p246
        %p532 = pneg %p243
        %p533 = pneg %p267
        %p534 = pneg %p264
        %p535 = pneg %p288
        %p536 = pneg %p285
        %p537 = pneg %p309
        %p538 = pneg %p306
        %p539 = pneg %p330
        %p540 = pneg %p327
        %p541 = pneg %p351
        %p542 = pneg %p348
        %p543 = pneg %p377
        %p544 = pneg %p374
        %s545 = sand.u32 %s364, 1
        %s546 = scalar_lea.sflag [#allocation5], %s545
        %s547 = sand.u32 %s364, 1
        %s548 = smul.addr %s547, 2
        %s549 = scalar_lea.vmem [#allocation4], %s548
        %s550 = smul.u32 2, %s31
        %s551 = smul.u32 2, %s31
        %p552 = scmp.lt.s32.totalorder %s551, 3
        %s553 = scalar_select %p552, %s551, 3
        %s554 = smul.addr %s553, 4
        %s555 = scalar_lea.vmem %s1, %s554
        %s556 = smul.u32 2, %s31
        %s557 = smul.u32 2, %s31
        %v558 = vld [vmem:[%s500] sm:$0xff]
        %v559 = vld [vmem:[%s500 + $0x8] sm:$0xff]
        %v560 = vunpack.c.l.bf16 %v558
        %v561 = vunpack.c.h.bf16 %v558
        %v562 = vunpack.c.l.bf16 %v559
        %v563 = vunpack.c.h.bf16 %v559
        %v564 = vld [vmem:[%s555] sm:$0xff]
        %v565 = vunpack.c.l.bf16 %v564
        %v566 = vunpack.c.h.bf16 %v564
        %v567 = vld [vmem:[%s2] sm:$0xff]
        %v568 = vld [vmem:[%s2 + $0x8] sm:$0xff]
        %v569 = vld [vmem:[%s2 + $0x10] sm:$0xff]
        %v570 = vld [vmem:[%s2 + $0x18] sm:$0xff]
        %v571 = vld [vmem:[%s3] sm:$0xff]
        %v572 = vld [vmem:[%s3 + $0x8] sm:$0xff]
        %v573 = vld [vmem:[%s3 + $0x10] sm:$0xff]
        %v574 = vld [vmem:[%s3 + $0x18] sm:$0xff]
        %576 = vset.pattern.permute.xlu0 0
        %577 = vperm.xlu0 %576, %v571
        %v578 = vpop.permute.xlu0 %577
        %581 = vset.pattern.permute.xlu0 0
        %582 = vperm.xlu0 %581, %v572
        %v583 = vpop.permute.xlu0 %582
        %586 = vset.pattern.permute.xlu0 0
        %587 = vperm.xlu0 %586, %v573
        %v588 = vpop.permute.xlu0 %587
        %591 = vset.pattern.permute.xlu0 0
        %592 = vperm.xlu0 %591, %v574
        %v593 = vpop.permute.xlu0 %592
        %vm595 = vcmask 130048
        %v597 = vsel %vm595, %v567, 0
        %v600 = vsel %vm595, %v568, 0
        %v603 = vsel %vm595, %v569, 0
        %v606 = vsel %vm595, %v570, 0
        %608 = vmatprep.subr.mxu0 %v561
        %609 = vmatpush1.msra.mxu0 %v560
        %610 = vmatprep.subr.mxu0 %v563
        %611 = vmatpush1.msra.mxu0 %v562
        %612 = vmatprep.subr.mxu0 0.0
        %613 = vmatpush1.msra.mxu0 0.0
        %614 = vmatprep.subr.mxu0 0.0
        %615 = vmatpush1.msra.mxu0 0.0
        %616 = vmatprep.subr.mxu0 0.0
        %617 = vmatpush1.msra.mxu0 0.0
        %618 = vmatprep.subr.mxu0 0.0
        %619 = vmatpush1.msra.mxu0 0.0
        %620 = vmatprep.subr.mxu0 0.0
        %621 = vmatpush1.msra.mxu0 0.0
        %622 = vmatprep.subr.mxu0 0.0
        %623 = vmatpush1.msra.mxu0 0.0
        %624 = vmatprep.subr.mxu0 0.0
        %625 = vmatpush1.msra.mxu0 0.0
        %626 = vmatprep.subr.mxu0 0.0
        %627 = vmatpush1.msra.mxu0 0.0
        %628 = vmatprep.subr.mxu0 0.0
        %629 = vmatpush1.msra.mxu0 0.0
        %630 = vmatprep.subr.mxu0 0.0
        %631 = vmatpush1.msra.mxu0 0.0
        %632 = vmatprep.subr.mxu0 0.0
        %633 = vmatpush1.msra.mxu0 0.0
        %634 = vmatprep.subr.mxu0 0.0
        %635 = vmatpush1.msra.mxu0 0.0
        %636 = vmatprep.subr.mxu0 0.0
        %637 = vmatpush1.msra.mxu0 0.0
        %638 = vmatprep.subr.mxu0 0.0
        %639 = vmatpush1.msra.mxu0 0.0
        %640 = vmatprep.subr.mxu0 0.0
        %641 = vmatpush1.msra.mxu0 0.0
        %642 = vmatprep.subr.mxu0 0.0
        %643 = vmatpush1.msra.mxu0 0.0
        %644 = vmatprep.subr.mxu0 0.0
        %645 = vmatpush1.msra.mxu0 0.0
        %646 = vmatprep.subr.mxu0 0.0
        %647 = vmatpush1.msra.mxu0 0.0
        %648 = vmatprep.subr.mxu0 0.0
        %649 = vmatpush1.msra.mxu0 0.0
        %650 = vmatprep.subr.mxu0 0.0
        %651 = vmatpush1.msra.mxu0 0.0
        %652 = vmatprep.subr.mxu0 0.0
        %653 = vmatpush1.msra.mxu0 0.0
        %654 = vmatprep.subr.mxu0 0.0
        %655 = vmatpush1.msra.mxu0 0.0
        %656 = vmatprep.subr.mxu0 0.0
        %657 = vmatpush1.msra.mxu0 0.0
        %658 = vmatprep.subr.mxu0 0.0
        %659 = vmatpush1.msra.mxu0 0.0
        %660 = vmatprep.subr.mxu0 0.0
        %661 = vmatpush1.msra.mxu0 0.0
        %662 = vmatprep.subr.mxu0 0.0
        %663 = vmatpush1.msra.mxu0 0.0
        %664 = vmatprep.subr.mxu0 0.0
        %665 = vmatpush1.msra.mxu0 0.0
        %666 = vmatprep.subr.mxu0 0.0
        %667 = vmatpush1.msra.mxu0 0.0
        %668 = vmatprep.subr.mxu0 0.0
        %669 = vmatpush1.msra.mxu0 0.0
        %670 = vmatprep.subr.mxu0 0.0
        %671 = vmatpush1.msra.mxu0 0.0
        %672 = vmatprep.mubr.f32.mxu0 0.0
        %673 = vmatmul.mubr.f32.gmra.mrb[0].mxu0 %v597
        %v674 = vpop.f32.mrb[0].mxu0
        %v675 = vadd.f32 %v578, %v674
        %v676 = vpop.f32.mrb[0].mxu0
        %v677 = vadd.f32 %v578, %v676
        %678 = vmatprep.mubr.f32.mxu0 0.0
        %679 = vmatmul.mubr.f32.gmra.mrb[0].mxu0 %v600
        %v680 = vpop.f32.mrb[0].mxu0
        %v681 = vadd.f32 %v583, %v680
        %v682 = vpop.f32.mrb[0].mxu0
        %v683 = vadd.f32 %v583, %v682
        %684 = vmatprep.mubr.f32.mxu0 0.0
        %685 = vmatmul.mubr.f32.gmra.mrb[0].mxu0 %v603
        %v686 = vpop.f32.mrb[0].mxu0
        %v687 = vadd.f32 %v588, %v686
        %v688 = vpop.f32.mrb[0].mxu0
        %v689 = vadd.f32 %v588, %v688
        %690 = vmatprep.mubr.f32.mxu0 0.0
        %691 = vmatmul.mubr.f32.gmra.mrb[0].mxu0 %v606
        %v692 = vpop.f32.mrb[0].mxu0
        %v693 = vadd.f32 %v593, %v692
        %v694 = vpop.f32.mrb[0].mxu0
        %v695 = vadd.f32 %v593, %v694
        %696 = vdwg.mxu0
        %v697 = vmax.f32 %v675, 0.0
        %v698 = vmax.f32 %v677, 0.0
        %v699 = vmax.f32 %v681, 0.0
        %v700 = vmax.f32 %v683, 0.0
        %v701 = vmax.f32 %v687, 0.0
        %v702 = vmax.f32 %v689, 0.0
        %v703 = vmax.f32 %v693, 0.0
        %v704 = vmax.f32 %v695, 0.0
        %v705 = vld [vmem:[%s4] sm:$0xff]
        %v706 = vld [vmem:[%s4 + $0x8] sm:$0xff]
        %v707 = vld [vmem:[%s4 + $0x10] sm:$0xff]
        %v708 = vld [vmem:[%s4 + $0x18] sm:$0xff]
        %v709 = vld [vmem:[%s5] sm:$0xff]
        %v710 = vld [vmem:[%s5 + $0x8] sm:$0xff]
        %v711 = vld [vmem:[%s5 + $0x10] sm:$0xff]
        %v712 = vld [vmem:[%s5 + $0x18] sm:$0xff]
        %714 = vset.pattern.permute.xlu0 0
        %715 = vperm.xlu0 %714, %v709
        %v716 = vpop.permute.xlu0 %715
        %719 = vset.pattern.permute.xlu0 0
        %720 = vperm.xlu0 %719, %v710
        %v721 = vpop.permute.xlu0 %720
        %724 = vset.pattern.permute.xlu0 0
        %725 = vperm.xlu0 %724, %v711
        %v726 = vpop.permute.xlu0 %725
        %729 = vset.pattern.permute.xlu0 0
        %730 = vperm.xlu0 %729, %v712
        %v731 = vpop.permute.xlu0 %730
        %vm733 = vcmask 261120
        %v735 = vsel %vm733, %v705, 0
        %v738 = vsel %vm733, %v706, 0
        %v741 = vsel %vm733, %v707, 0
        %v744 = vsel %vm733, %v708, 0
        %746 = vmatprep.subr.mxu0 %v698
        %747 = vmatpush1.msra.mxu0 %v697
        %748 = vmatprep.subr.mxu0 %v700
        %749 = vmatpush1.msra.mxu0 %v699
        %750 = vmatprep.subr.mxu0 %v702
        %751 = vmatpush1.msra.mxu0 %v701
        %752 = vmatprep.subr.mxu0 %v704
        %753 = vmatpush1.msra.mxu0 %v703
        %754 = vmatprep.subr.mxu0 0.0
        %755 = vmatpush1.msra.mxu0 0.0
        %756 = vmatprep.subr.mxu0 0.0
        %757 = vmatpush1.msra.mxu0 0.0
        %758 = vmatprep.subr.mxu0 0.0
        %759 = vmatpush1.msra.mxu0 0.0
        %760 = vmatprep.subr.mxu0 0.0
        %761 = vmatpush1.msra.mxu0 0.0
        %762 = vmatprep.subr.mxu0 0.0
        %763 = vmatpush1.msra.mxu0 0.0
        %764 = vmatprep.subr.mxu0 0.0
        %765 = vmatpush1.msra.mxu0 0.0
        %766 = vmatprep.subr.mxu0 0.0
        %767 = vmatpush1.msra.mxu0 0.0
        %768 = vmatprep.subr.mxu0 0.0
        %769 = vmatpush1.msra.mxu0 0.0
        %770 = vmatprep.subr.mxu0 0.0
        %771 = vmatpush1.msra.mxu0 0.0
        %772 = vmatprep.subr.mxu0 0.0
        %773 = vmatpush1.msra.mxu0 0.0
        %774 = vmatprep.subr.mxu0 0.0
        %775 = vmatpush1.msra.mxu0 0.0
        %776 = vmatprep.subr.mxu0 0.0
        %777 = vmatpush1.msra.mxu0 0.0
        %778 = vmatprep.subr.mxu0 0.0
        %779 = vmatpush1.msra.mxu0 0.0
        %780 = vmatprep.subr.mxu0 0.0
        %781 = vmatpush1.msra.mxu0 0.0
        %782 = vmatprep.subr.mxu0 0.0
        %783 = vmatpush1.msra.mxu0 0.0
        %784 = vmatprep.subr.mxu0 0.0
        %785 = vmatpush1.msra.mxu0 0.0
        %786 = vmatprep.subr.mxu0 0.0
        %787 = vmatpush1.msra.mxu0 0.0
        %788 = vmatprep.subr.mxu0 0.0
        %789 = vmatpush1.msra.mxu0 0.0
        %790 = vmatprep.subr.mxu0 0.0
        %791 = vmatpush1.msra.mxu0 0.0
        %792 = vmatprep.subr.mxu0 0.0
        %793 = vmatpush1.msra.mxu0 0.0
        %794 = vmatprep.subr.mxu0 0.0
        %795 = vmatpush1.msra.mxu0 0.0
        %796 = vmatprep.subr.mxu0 0.0
        %797 = vmatpush1.msra.mxu0 0.0
        %798 = vmatprep.subr.mxu0 0.0
        %799 = vmatpush1.msra.mxu0 0.0
        %800 = vmatprep.subr.mxu0 0.0
        %801 = vmatpush1.msra.mxu0 0.0
        %802 = vmatprep.subr.mxu0 0.0
        %803 = vmatpush1.msra.mxu0 0.0
        %804 = vmatprep.subr.mxu0 0.0
        %805 = vmatpush1.msra.mxu0 0.0
        %806 = vmatprep.subr.mxu0 0.0
        %807 = vmatpush1.msra.mxu0 0.0
        %808 = vmatprep.subr.mxu0 0.0
        %809 = vmatpush1.msra.mxu0 0.0
        %810 = vmatprep.mubr.f32.mxu0 0.0
        %811 = vmatmul.mubr.f32.gmra.mrb[0].mxu0 %v735
        %v812 = vpop.f32.mrb[0].mxu0
        %v813 = vadd.f32 %v716, %v812
        %v814 = vpop.f32.mrb[0].mxu0
        %v815 = vadd.f32 %v716, %v814
        %816 = vmatprep.mubr.f32.mxu0 0.0
        %817 = vmatmul.mubr.f32.gmra.mrb[0].mxu0 %v738
        %v818 = vpop.f32.mrb[0].mxu0
        %v819 = vadd.f32 %v721, %v818
        %v820 = vpop.f32.mrb[0].mxu0
        %v821 = vadd.f32 %v721, %v820
        %822 = vmatprep.mubr.f32.mxu0 0.0
        %823 = vmatmul.mubr.f32.gmra.mrb[0].mxu0 %v741
        %v824 = vpop.f32.mrb[0].mxu0
        %v825 = vadd.f32 %v726, %v824
        %v826 = vpop.f32.mrb[0].mxu0
        %v827 = vadd.f32 %v726, %v826
        %828 = vmatprep.mubr.f32.mxu0 0.0
        %829 = vmatmul.mubr.f32.gmra.mrb[0].mxu0 %v744
        %v830 = vpop.f32.mrb[0].mxu0
        %v831 = vadd.f32 %v731, %v830
        %v832 = vpop.f32.mrb[0].mxu0
        %v833 = vadd.f32 %v731, %v832
        %834 = vdwg.mxu0
        %v835 = vld [vmem:[%s6] sm:$0xff]
        %v836 = vld [vmem:[%s6 + $0x8] sm:$0xff]
        %v837 = vld [vmem:[%s6 + $0x10] sm:$0xff]
        %v838 = vld [vmem:[%s6 + $0x18] sm:$0xff]
        %v839 = vld [vmem:[%s7] sm:$0xff]
        %v840 = vld [vmem:[%s7 + $0x8] sm:$0xff]
        %v841 = vld [vmem:[%s7 + $0x10] sm:$0xff]
        %v842 = vld [vmem:[%s7 + $0x18] sm:$0xff]
        %844 = vset.pattern.permute.xlu0 0
        %845 = vperm.xlu0 %844, %v839
        %v846 = vpop.permute.xlu0 %845
        %849 = vset.pattern.permute.xlu0 0
        %850 = vperm.xlu0 %849, %v840
        %v851 = vpop.permute.xlu0 %850
        %854 = vset.pattern.permute.xlu0 0
        %855 = vperm.xlu0 %854, %v841
        %v856 = vpop.permute.xlu0 %855
        %859 = vset.pattern.permute.xlu0 0
        %860 = vperm.xlu0 %859, %v842
        %v861 = vpop.permute.xlu0 %860
        %vm863 = vcmask 64512
        %v865 = vsel %vm863, %v835, 0
        %v868 = vsel %vm863, %v836, 0
        %v871 = vsel %vm863, %v837, 0
        %v874 = vsel %vm863, %v838, 0
        %876 = vmatprep.subr.mxu0 %v566
        %877 = vmatpush1.msra.mxu0 %v565
        %878 = vmatprep.subr.mxu0 0.0
        %879 = vmatpush1.msra.mxu0 0.0
        %880 = vmatprep.subr.mxu0 0.0
        %881 = vmatpush1.msra.mxu0 0.0
        %882 = vmatprep.subr.mxu0 0.0
        %883 = vmatpush1.msra.mxu0 0.0
        %884 = vmatprep.subr.mxu0 0.0
        %885 = vmatpush1.msra.mxu0 0.0
        %886 = vmatprep.subr.mxu0 0.0
        %887 = vmatpush1.msra.mxu0 0.0
        %888 = vmatprep.subr.mxu0 0.0
        %889 = vmatpush1.msra.mxu0 0.0
        %890 = vmatprep.subr.mxu0 0.0
        %891 = vmatpush1.msra.mxu0 0.0
        %892 = vmatprep.subr.mxu0 0.0
        %893 = vmatpush1.msra.mxu0 0.0
        %894 = vmatprep.subr.mxu0 0.0
        %895 = vmatpush1.msra.mxu0 0.0
        %896 = vmatprep.subr.mxu0 0.0
        %897 = vmatpush1.msra.mxu0 0.0
        %898 = vmatprep.subr.mxu0 0.0
        %899 = vmatpush1.msra.mxu0 0.0
        %900 = vmatprep.subr.mxu0 0.0
        %901 = vmatpush1.msra.mxu0 0.0
        %902 = vmatprep.subr.mxu0 0.0
        %903 = vmatpush1.msra.mxu0 0.0
        %904 = vmatprep.subr.mxu0 0.0
        %905 = vmatpush1.msra.mxu0 0.0
        %906 = vmatprep.subr.mxu0 0.0
        %907 = vmatpush1.msra.mxu0 0.0
        %908 = vmatprep.subr.mxu0 0.0
        %909 = vmatpush1.msra.mxu0 0.0
        %910 = vmatprep.subr.mxu0 0.0
        %911 = vmatpush1.msra.mxu0 0.0
        %912 = vmatprep.subr.mxu0 0.0
        %913 = vmatpush1.msra.mxu0 0.0
        %914 = vmatprep.subr.mxu0 0.0
        %915 = vmatpush1.msra.mxu0 0.0
        %916 = vmatprep.subr.mxu0 0.0
        %917 = vmatpush1.msra.mxu0 0.0
        %918 = vmatprep.subr.mxu0 0.0
        %919 = vmatpush1.msra.mxu0 0.0
        %920 = vmatprep.subr.mxu0 0.0
        %921 = vmatpush1.msra.mxu0 0.0
        %922 = vmatprep.subr.mxu0 0.0
        %923 = vmatpush1.msra.mxu0 0.0
        %924 = vmatprep.subr.mxu0 0.0
        %925 = vmatpush1.msra.mxu0 0.0
        %926 = vmatprep.subr.mxu0 0.0
        %927 = vmatpush1.msra.mxu0 0.0
        %928 = vmatprep.subr.mxu0 0.0
        %929 = vmatpush1.msra.mxu0 0.0
        %930 = vmatprep.subr.mxu0 0.0
        %931 = vmatpush1.msra.mxu0 0.0
        %932 = vmatprep.subr.mxu0 0.0
        %933 = vmatpush1.msra.mxu0 0.0
        %934 = vmatprep.subr.mxu0 0.0
        %935 = vmatpush1.msra.mxu0 0.0
        %936 = vmatprep.subr.mxu0 0.0
        %937 = vmatpush1.msra.mxu0 0.0
        %938 = vmatprep.subr.mxu0 0.0
        %939 = vmatpush1.msra.mxu0 0.0
        %940 = vmatprep.mubr.f32.mxu0 0.0
        %941 = vmatmul.mubr.f32.gmra.mrb[0].mxu0 %v865
        %v942 = vpop.f32.mrb[0].mxu0
        %v943 = vadd.f32 %v846, %v942
        %v944 = vpop.f32.mrb[0].mxu0
        %v945 = vadd.f32 %v846, %v944
        %946 = vmatprep.mubr.f32.mxu0 0.0
        %947 = vmatmul.mubr.f32.gmra.mrb[0].mxu0 %v868
        %v948 = vpop.f32.mrb[0].mxu0
        %v949 = vadd.f32 %v851, %v948
        %v950 = vpop.f32.mrb[0].mxu0
        %v951 = vadd.f32 %v851, %v950
        %952 = vmatprep.mubr.f32.mxu0 0.0
        %953 = vmatmul.mubr.f32.gmra.mrb[0].mxu0 %v871
        %v954 = vpop.f32.mrb[0].mxu0
        %v955 = vadd.f32 %v856, %v954
        %v956 = vpop.f32.mrb[0].mxu0
        %v957 = vadd.f32 %v856, %v956
        %958 = vmatprep.mubr.f32.mxu0 0.0
        %959 = vmatmul.mubr.f32.gmra.mrb[0].mxu0 %v874
        %v960 = vpop.f32.mrb[0].mxu0
        %v961 = vadd.f32 %v861, %v960
        %v962 = vpop.f32.mrb[0].mxu0
        %v963 = vadd.f32 %v861, %v962
        %964 = vdwg.mxu0
        %v965 = vmax.f32 %v943, 0.0
        %v966 = vmax.f32 %v945, 0.0
        %v967 = vmax.f32 %v949, 0.0
        %v968 = vmax.f32 %v951, 0.0
        %v969 = vmax.f32 %v955, 0.0
        %v970 = vmax.f32 %v957, 0.0
        %v971 = vmax.f32 %v961, 0.0
        %v972 = vmax.f32 %v963, 0.0
        %v973 = vld [vmem:[%s8] sm:$0xff]
        %v974 = vld [vmem:[%s8 + $0x8] sm:$0xff]
        %v975 = vld [vmem:[%s9] sm:$0xff]
        %v976 = vld [vmem:[%s9 + $0x8] sm:$0xff]
        %978 = vset.pattern.permute.xlu0 0
        %979 = vperm.xlu0 %978, %v975
        %v980 = vpop.permute.xlu0 %979
        %983 = vset.pattern.permute.xlu0 0
        %984 = vperm.xlu0 %983, %v976
        %v985 = vpop.permute.xlu0 %984
        %v988 = vsel %vm733, %v973, 0
        %v991 = vsel %vm733, %v974, 0
        %993 = vmatprep.subr.mxu0 %v966
        %994 = vmatpush1.msra.mxu0 %v965
        %995 = vmatprep.subr.mxu0 %v968
        %996 = vmatpush1.msra.mxu0 %v967
        %997 = vmatprep.subr.mxu0 %v970
        %998 = vmatpush1.msra.mxu0 %v969
        %999 = vmatprep.subr.mxu0 %v972
        %1000 = vmatpush1.msra.mxu0 %v971
        %1001 = vmatprep.subr.mxu0 0.0
        %1002 = vmatpush1.msra.mxu0 0.0
        %1003 = vmatprep.subr.mxu0 0.0
        %1004 = vmatpush1.msra.mxu0 0.0
        %1005 = vmatprep.subr.mxu0 0.0
        %1006 = vmatpush1.msra.mxu0 0.0
        %1007 = vmatprep.subr.mxu0 0.0
        %1008 = vmatpush1.msra.mxu0 0.0
        %1009 = vmatprep.subr.mxu0 0.0
        %1010 = vmatpush1.msra.mxu0 0.0
        %1011 = vmatprep.subr.mxu0 0.0
        %1012 = vmatpush1.msra.mxu0 0.0
        %1013 = vmatprep.subr.mxu0 0.0
        %1014 = vmatpush1.msra.mxu0 0.0
        %1015 = vmatprep.subr.mxu0 0.0
        %1016 = vmatpush1.msra.mxu0 0.0
        %1017 = vmatprep.subr.mxu0 0.0
        %1018 = vmatpush1.msra.mxu0 0.0
        %1019 = vmatprep.subr.mxu0 0.0
        %1020 = vmatpush1.msra.mxu0 0.0
        %1021 = vmatprep.subr.mxu0 0.0
        %1022 = vmatpush1.msra.mxu0 0.0
        %1023 = vmatprep.subr.mxu0 0.0
        %1024 = vmatpush1.msra.mxu0 0.0
        %1025 = vmatprep.subr.mxu0 0.0
        %1026 = vmatpush1.msra.mxu0 0.0
        %1027 = vmatprep.subr.mxu0 0.0
        %1028 = vmatpush1.msra.mxu0 0.0
        %1029 = vmatprep.subr.mxu0 0.0
        %1030 = vmatpush1.msra.mxu0 0.0
        %1031 = vmatprep.subr.mxu0 0.0
        %1032 = vmatpush1.msra.mxu0 0.0
        %1033 = vmatprep.subr.mxu0 0.0
        %1034 = vmatpush1.msra.mxu0 0.0
        %1035 = vmatprep.subr.mxu0 0.0
        %1036 = vmatpush1.msra.mxu0 0.0
        %1037 = vmatprep.subr.mxu0 0.0
        %1038 = vmatpush1.msra.mxu0 0.0
        %1039 = vmatprep.subr.mxu0 0.0
        %1040 = vmatpush1.msra.mxu0 0.0
        %1041 = vmatprep.subr.mxu0 0.0
        %1042 = vmatpush1.msra.mxu0 0.0
        %1043 = vmatprep.subr.mxu0 0.0
        %1044 = vmatpush1.msra.mxu0 0.0
        %1045 = vmatprep.subr.mxu0 0.0
        %1046 = vmatpush1.msra.mxu0 0.0
        %1047 = vmatprep.subr.mxu0 0.0
        %1048 = vmatpush1.msra.mxu0 0.0
        %1049 = vmatprep.subr.mxu0 0.0
        %1050 = vmatpush1.msra.mxu0 0.0
        %1051 = vmatprep.subr.mxu0 0.0
        %1052 = vmatpush1.msra.mxu0 0.0
        %1053 = vmatprep.subr.mxu0 0.0
        %1054 = vmatpush1.msra.mxu0 0.0
        %1055 = vmatprep.subr.mxu0 0.0
        %1056 = vmatpush1.msra.mxu0 0.0
        %1057 = vmatprep.mubr.f32.mxu0 0.0
        %1058 = vmatmul.mubr.f32.gmra.mrb[0].mxu0 %v988
        %v1059 = vpop.f32.mrb[0].mxu0
        %v1060 = vadd.f32 %v980, %v1059
        %v1061 = vpop.f32.mrb[0].mxu0
        %v1062 = vadd.f32 %v980, %v1061
        %1063 = vmatprep.mubr.f32.mxu0 0.0
        %1064 = vmatmul.mubr.f32.gmra.mrb[0].mxu0 %v991
        %v1065 = vpop.f32.mrb[0].mxu0
        %v1066 = vadd.f32 %v985, %v1065
        %v1067 = vpop.f32.mrb[0].mxu0
        %v1068 = vadd.f32 %v985, %v1067
        %1069 = vdwg.mxu0
        %v1070 = vld [vmem:[%s10] sm:$0xff]
        %v1071 = vld [vmem:[%s10 + $0x8] sm:$0xff]
        %v1072 = vld [vmem:[%s10 + $0x10] sm:$0xff]
        %v1073 = vld [vmem:[%s10 + $0x18] sm:$0xff]
        %v1074 = vld [vmem:[%s11] sm:$0xff]
        %v1075 = vld [vmem:[%s11 + $0x8] sm:$0xff]
        %v1076 = vld [vmem:[%s11 + $0x10] sm:$0xff]
        %v1077 = vld [vmem:[%s11 + $0x18] sm:$0xff]
        %v1079 = vsel %vm595, %v1074, 0
        %v1082 = vsel %vm595, %v1075, 0
        %v1085 = vsel %vm595, %v1076, 0
        %v1088 = vsel %vm595, %v1077, 0
        %1090 = vmatprep.subr.mxu0 %v1062
        %1091 = vmatpush1.msra.mxu0 %v1060
        %1092 = vmatprep.subr.mxu0 %v1068
        %1093 = vmatpush1.msra.mxu0 %v1066
        %1094 = vmatprep.subr.mxu0 0.0
        %1095 = vmatpush1.msra.mxu0 0.0
        %1096 = vmatprep.subr.mxu0 0.0
        %1097 = vmatpush1.msra.mxu0 0.0
        %1098 = vmatprep.subr.mxu0 0.0
        %1099 = vmatpush1.msra.mxu0 0.0
        %1100 = vmatprep.subr.mxu0 0.0
        %1101 = vmatpush1.msra.mxu0 0.0
        %1102 = vmatprep.subr.mxu0 0.0
        %1103 = vmatpush1.msra.mxu0 0.0
        %1104 = vmatprep.subr.mxu0 0.0
        %1105 = vmatpush1.msra.mxu0 0.0
        %1106 = vmatprep.subr.mxu0 0.0
        %1107 = vmatpush1.msra.mxu0 0.0
        %1108 = vmatprep.subr.mxu0 0.0
        %1109 = vmatpush1.msra.mxu0 0.0
        %1110 = vmatprep.subr.mxu0 0.0
        %1111 = vmatpush1.msra.mxu0 0.0
        %1112 = vmatprep.subr.mxu0 0.0
        %1113 = vmatpush1.msra.mxu0 0.0
        %1114 = vmatprep.subr.mxu0 0.0
        %1115 = vmatpush1.msra.mxu0 0.0
        %1116 = vmatprep.subr.mxu0 0.0
        %1117 = vmatpush1.msra.mxu0 0.0
        %1118 = vmatprep.subr.mxu0 0.0
        %1119 = vmatpush1.msra.mxu0 0.0
        %1120 = vmatprep.subr.mxu0 0.0
        %1121 = vmatpush1.msra.mxu0 0.0
        %1122 = vmatprep.subr.mxu0 0.0
        %1123 = vmatpush1.msra.mxu0 0.0
        %1124 = vmatprep.subr.mxu0 0.0
        %1125 = vmatpush1.msra.mxu0 0.0
        %1126 = vmatprep.subr.mxu0 0.0
        %1127 = vmatpush1.msra.mxu0 0.0
        %1128 = vmatprep.subr.mxu0 0.0
        %1129 = vmatpush1.msra.mxu0 0.0
        %1130 = vmatprep.subr.mxu0 0.0
        %1131 = vmatpush1.msra.mxu0 0.0
        %1132 = vmatprep.subr.mxu0 0.0
        %1133 = vmatpush1.msra.mxu0 0.0
        %1134 = vmatprep.subr.mxu0 0.0
        %1135 = vmatpush1.msra.mxu0 0.0
        %1136 = vmatprep.subr.mxu0 0.0
        %1137 = vmatpush1.msra.mxu0 0.0
        %1138 = vmatprep.subr.mxu0 0.0
        %1139 = vmatpush1.msra.mxu0 0.0
        %1140 = vmatprep.subr.mxu0 0.0
        %1141 = vmatpush1.msra.mxu0 0.0
        %1142 = vmatprep.subr.mxu0 0.0
        %1143 = vmatpush1.msra.mxu0 0.0
        %1144 = vmatprep.subr.mxu0 0.0
        %1145 = vmatpush1.msra.mxu0 0.0
        %1146 = vmatprep.subr.mxu0 0.0
        %1147 = vmatpush1.msra.mxu0 0.0
        %1148 = vmatprep.subr.mxu0 0.0
        %1149 = vmatpush1.msra.mxu0 0.0
        %1150 = vmatprep.subr.mxu0 0.0
        %1151 = vmatpush1.msra.mxu0 0.0
        %1152 = vmatprep.subr.mxu0 0.0
        %1153 = vmatpush1.msra.mxu0 0.0
        %1154 = vmatprep.mubr.f32.mxu0 0.0
        %1155 = vmatmul.mubr.f32.gmra.mrb[0].mxu0 %v1079
        %v1156 = vpop.f32.mrb[0].mxu0
        %v1157 = vadd.f32 0.0, %v1156
        %v1158 = vpop.f32.mrb[0].mxu0
        %v1159 = vadd.f32 0.0, %v1158
        %1160 = vmatprep.mubr.f32.mxu0 0.0
        %1161 = vmatmul.mubr.f32.gmra.mrb[0].mxu0 %v1082
        %v1162 = vpop.f32.mrb[0].mxu0
        %v1163 = vadd.f32 0.0, %v1162
        %v1164 = vpop.f32.mrb[0].mxu0
        %v1165 = vadd.f32 0.0, %v1164
        %1166 = vmatprep.mubr.f32.mxu0 0.0
        %1167 = vmatmul.mubr.f32.gmra.mrb[0].mxu0 %v1085
        %v1168 = vpop.f32.mrb[0].mxu0
        %v1169 = vadd.f32 0.0, %v1168
        %v1170 = vpop.f32.mrb[0].mxu0
        %v1171 = vadd.f32 0.0, %v1170
        %1172 = vmatprep.mubr.f32.mxu0 0.0
        %1173 = vmatmul.mubr.f32.gmra.mrb[0].mxu0 %v1088
        %v1174 = vpop.f32.mrb[0].mxu0
        %v1175 = vadd.f32 0.0, %v1174
        %v1176 = vpop.f32.mrb[0].mxu0
        %v1177 = vadd.f32 0.0, %v1176
        %1178 = vdwg.mxu0
        %v1180 = vsel %vm733, %v1070, 0
        %v1183 = vsel %vm733, %v1071, 0
        %v1186 = vsel %vm733, %v1072, 0
        %v1189 = vsel %vm733, %v1073, 0
        %1191 = vmatprep.subr.mxu0 %v815
        %1192 = vmatpush1.msra.mxu0 %v813
        %1193 = vmatprep.subr.mxu0 %v821
        %1194 = vmatpush1.msra.mxu0 %v819
        %1195 = vmatprep.subr.mxu0 %v827
        %1196 = vmatpush1.msra.mxu0 %v825
        %1197 = vmatprep.subr.mxu0 %v833
        %1198 = vmatpush1.msra.mxu0 %v831
        %1199 = vmatprep.subr.mxu0 0.0
        %1200 = vmatpush1.msra.mxu0 0.0
        %1201 = vmatprep.subr.mxu0 0.0
        %1202 = vmatpush1.msra.mxu0 0.0
        %1203 = vmatprep.subr.mxu0 0.0
        %1204 = vmatpush1.msra.mxu0 0.0
        %1205 = vmatprep.subr.mxu0 0.0
        %1206 = vmatpush1.msra.mxu0 0.0
        %1207 = vmatprep.subr.mxu0 0.0
        %1208 = vmatpush1.msra.mxu0 0.0
        %1209 = vmatprep.subr.mxu0 0.0
        %1210 = vmatpush1.msra.mxu0 0.0
        %1211 = vmatprep.subr.mxu0 0.0
        %1212 = vmatpush1.msra.mxu0 0.0
        %1213 = vmatprep.subr.mxu0 0.0
        %1214 = vmatpush1.msra.mxu0 0.0
        %1215 = vmatprep.subr.mxu0 0.0
        %1216 = vmatpush1.msra.mxu0 0.0
        %1217 = vmatprep.subr.mxu0 0.0
        %1218 = vmatpush1.msra.mxu0 0.0
        %1219 = vmatprep.subr.mxu0 0.0
        %1220 = vmatpush1.msra.mxu0 0.0
        %1221 = vmatprep.subr.mxu0 0.0
        %1222 = vmatpush1.msra.mxu0 0.0
        %1223 = vmatprep.subr.mxu0 0.0
        %1224 = vmatpush1.msra.mxu0 0.0
        %1225 = vmatprep.subr.mxu0 0.0
        %1226 = vmatpush1.msra.mxu0 0.0
        %1227 = vmatprep.subr.mxu0 0.0
        %1228 = vmatpush1.msra.mxu0 0.0
        %1229 = vmatprep.subr.mxu0 0.0
        %1230 = vmatpush1.msra.mxu0 0.0
        %1231 = vmatprep.subr.mxu0 0.0
        %1232 = vmatpush1.msra.mxu0 0.0
        %1233 = vmatprep.subr.mxu0 0.0
        %1234 = vmatpush1.msra.mxu0 0.0
        %1235 = vmatprep.subr.mxu0 0.0
        %1236 = vmatpush1.msra.mxu0 0.0
        %1237 = vmatprep.subr.mxu0 0.0
        %1238 = vmatpush1.msra.mxu0 0.0
        %1239 = vmatprep.subr.mxu0 0.0
        %1240 = vmatpush1.msra.mxu0 0.0
        %1241 = vmatprep.subr.mxu0 0.0
        %1242 = vmatpush1.msra.mxu0 0.0
        %1243 = vmatprep.subr.mxu0 0.0
        %1244 = vmatpush1.msra.mxu0 0.0
        %1245 = vmatprep.subr.mxu0 0.0
        %1246 = vmatpush1.msra.mxu0 0.0
        %1247 = vmatprep.subr.mxu0 0.0
        %1248 = vmatpush1.msra.mxu0 0.0
        %1249 = vmatprep.subr.mxu0 0.0
        %1250 = vmatpush1.msra.mxu0 0.0
        %1251 = vmatprep.subr.mxu0 0.0
        %1252 = vmatpush1.msra.mxu0 0.0
        %1253 = vmatprep.subr.mxu0 0.0
        %1254 = vmatpush1.msra.mxu0 0.0
        %1255 = vmatprep.mubr.f32.mxu0 0.0
        %1256 = vmatmul.mubr.f32.gmra.mrb[0].mxu0 %v1180
        %v1257 = vpop.f32.mrb[0].mxu0
        %v1258 = vadd.f32 %v1157, %v1257
        %v1259 = vpop.f32.mrb[0].mxu0
        %v1260 = vadd.f32 %v1159, %v1259
        %1261 = vmatprep.mubr.f32.mxu0 0.0
        %1262 = vmatmul.mubr.f32.gmra.mrb[0].mxu0 %v1183
        %v1263 = vpop.f32.mrb[0].mxu0
        %v1264 = vadd.f32 %v1163, %v1263
        %v1265 = vpop.f32.mrb[0].mxu0
        %v1266 = vadd.f32 %v1165, %v1265
        %1267 = vmatprep.mubr.f32.mxu0 0.0
        %1268 = vmatmul.mubr.f32.gmra.mrb[0].mxu0 %v1186
        %v1269 = vpop.f32.mrb[0].mxu0
        %v1270 = vadd.f32 %v1169, %v1269
        %v1271 = vpop.f32.mrb[0].mxu0
        %v1272 = vadd.f32 %v1171, %v1271
        %1273 = vmatprep.mubr.f32.mxu0 0.0
        %1274 = vmatmul.mubr.f32.gmra.mrb[0].mxu0 %v1189
        %v1275 = vpop.f32.mrb[0].mxu0
        %v1276 = vadd.f32 %v1175, %v1275
        %v1277 = vpop.f32.mrb[0].mxu0
        %v1278 = vadd.f32 %v1177, %v1277
        %1279 = vdwg.mxu0
        %v1280 = vld [vmem:[%s12] sm:$0xff]
        %v1281 = vld [vmem:[%s12 + $0x8] sm:$0xff]
        %v1282 = vld [vmem:[%s12 + $0x10] sm:$0xff]
        %v1283 = vld [vmem:[%s12 + $0x18] sm:$0xff]
        %1285 = vset.pattern.permute.xlu0 0
        %1286 = vperm.xlu0 %1285, %v1280
        %v1287 = vpop.permute.xlu0 %1286
        %1290 = vset.pattern.permute.xlu0 0
        %1291 = vperm.xlu0 %1290, %v1281
        %v1292 = vpop.permute.xlu0 %1291
        %1295 = vset.pattern.permute.xlu0 0
        %1296 = vperm.xlu0 %1295, %v1282
        %v1297 = vpop.permute.xlu0 %1296
        %1300 = vset.pattern.permute.xlu0 0
        %1301 = vperm.xlu0 %1300, %v1283
        %v1302 = vpop.permute.xlu0 %1301
        %v1304 = vadd.f32 %v1258, %v1287
        %v1305 = vadd.f32 %v1260, %v1287
        %v1306 = vadd.f32 %v1264, %v1292
        %v1307 = vadd.f32 %v1266, %v1292
        %v1308 = vadd.f32 %v1270, %v1297
        %v1309 = vadd.f32 %v1272, %v1297
        %v1310 = vadd.f32 %v1276, %v1302
        %v1311 = vadd.f32 %v1278, %v1302
        %v1312 = vmax.f32 %v1304, 0.0
        %v1313 = vmax.f32 %v1305, 0.0
        %v1314 = vmax.f32 %v1306, 0.0
        %v1315 = vmax.f32 %v1307, 0.0
        %v1316 = vmax.f32 %v1308, 0.0
        %v1317 = vmax.f32 %v1309, 0.0
        %v1318 = vmax.f32 %v1310, 0.0
        %v1319 = vmax.f32 %v1311, 0.0
        %v1320 = vld [vmem:[%s13] sm:$0x1]
        %v1321 = vld [vmem:[#allocation2] sm:$0x1]
        %1323 = vset.pattern.permute.xlu0 0
        %1324 = vperm.xlu0 %1323, %v1321
        %v1325 = vpop.permute.xlu0 %1324
        %v1327 = vlaneseq
        %v1328 = vshrl.u32 %v1327, 7
        %v1329 = vsub.s32 0, %v1328
        %v1330 = vrot.slane %v1325, %v1329
        %v1332 = vsel %vm733, %v1320, 0
        %1334 = vmatprep.subr.mxu0 %v1313
        %1335 = vmatpush1.msra.mxu0 %v1312
        %1336 = vmatprep.subr.mxu0 %v1315
        %1337 = vmatpush1.msra.mxu0 %v1314
        %1338 = vmatprep.subr.mxu0 %v1317
        %1339 = vmatpush1.msra.mxu0 %v1316
        %1340 = vmatprep.subr.mxu0 %v1319
        %1341 = vmatpush1.msra.mxu0 %v1318
        %1342 = vmatprep.subr.mxu0 0.0
        %1343 = vmatpush1.msra.mxu0 0.0
        %1344 = vmatprep.subr.mxu0 0.0
        %1345 = vmatpush1.msra.mxu0 0.0
        %1346 = vmatprep.subr.mxu0 0.0
        %1347 = vmatpush1.msra.mxu0 0.0
        %1348 = vmatprep.subr.mxu0 0.0
        %1349 = vmatpush1.msra.mxu0 0.0
        %1350 = vmatprep.subr.mxu0 0.0
        %1351 = vmatpush1.msra.mxu0 0.0
        %1352 = vmatprep.subr.mxu0 0.0
        %1353 = vmatpush1.msra.mxu0 0.0
        %1354 = vmatprep.subr.mxu0 0.0
        %1355 = vmatpush1.msra.mxu0 0.0
        %1356 = vmatprep.subr.mxu0 0.0
        %1357 = vmatpush1.msra.mxu0 0.0
        %1358 = vmatprep.subr.mxu0 0.0
        %1359 = vmatpush1.msra.mxu0 0.0
        %1360 = vmatprep.subr.mxu0 0.0
        %1361 = vmatpush1.msra.mxu0 0.0
        %1362 = vmatprep.subr.mxu0 0.0
        %1363 = vmatpush1.msra.mxu0 0.0
        %1364 = vmatprep.subr.mxu0 0.0
        %1365 = vmatpush1.msra.mxu0 0.0
        %1366 = vmatprep.subr.mxu0 0.0
        %1367 = vmatpush1.msra.mxu0 0.0
        %1368 = vmatprep.subr.mxu0 0.0
        %1369 = vmatpush1.msra.mxu0 0.0
        %1370 = vmatprep.subr.mxu0 0.0
        %1371 = vmatpush1.msra.mxu0 0.0
        %1372 = vmatprep.subr.mxu0 0.0
        %1373 = vmatpush1.msra.mxu0 0.0
        %1374 = vmatprep.subr.mxu0 0.0
        %1375 = vmatpush1.msra.mxu0 0.0
        %1376 = vmatprep.subr.mxu0 0.0
        %1377 = vmatpush1.msra.mxu0 0.0
        %1378 = vmatprep.subr.mxu0 0.0
        %1379 = vmatpush1.msra.mxu0 0.0
        %1380 = vmatprep.subr.mxu0 0.0
        %1381 = vmatpush1.msra.mxu0 0.0
        %1382 = vmatprep.subr.mxu0 0.0
        %1383 = vmatpush1.msra.mxu0 0.0
        %1384 = vmatprep.subr.mxu0 0.0
        %1385 = vmatpush1.msra.mxu0 0.0
        %1386 = vmatprep.subr.mxu0 0.0
        %1387 = vmatpush1.msra.mxu0 0.0
        %1388 = vmatprep.subr.mxu0 0.0
        %1389 = vmatpush1.msra.mxu0 0.0
        %1390 = vmatprep.subr.mxu0 0.0
        %1391 = vmatpush1.msra.mxu0 0.0
        %1392 = vmatprep.subr.mxu0 0.0
        %1393 = vmatpush1.msra.mxu0 0.0
        %1394 = vmatprep.subr.mxu0 0.0
        %1395 = vmatpush1.msra.mxu0 0.0
        %1396 = vmatprep.subr.mxu0 0.0
        %1397 = vmatpush1.msra.mxu0 0.0
        %1398 = vmatprep.mubr.f32.mxu0 0.0
        %1399 = vmatmul.mubr.f32.gmra.mrb[0].mxu0 %v1332
        %v1400 = vpop.f32.mrb[0].mxu0
        %v1401 = vadd.f32 %v1330, %v1400
        %v1402 = vpop.f32.mrb[0].mxu0
        %v1403 = vadd.f32 %v1330, %v1402
        %1404 = vdwg.mxu0
        %v1407 = vcombine.low %v1401, %v1403
        %v1409 = vunpack.c.l.s4 1966171168
        %v1410 = vunpack.c.0.s8 %v1409
        %v1411 = vlaneseq
        %v1412 = vshrl.u32 %v1411, 7
        %v1413 = vsub.s32 %v1410, %v1412
        %v1414 = vrot.slane %v1407, %v1413
        %v1416 = vunpack.c.l.s4 1966171168
        %v1417 = vunpack.c.0.s8 %v1416
        %v1418 = vlaneseq
        %v1419 = vshrl.u32 %v1418, 7
        %v1420 = vsub.s32 %v1417, %v1419
        %v1421 = vrot.slane %v1414, %v1420
        %v1423 = vlaneseq
        %vm1424 = vcmp.ge.s32.totalorder %v1423, 0
        %vm1425 = vcmp.lt.s32.totalorder %v1423, 256
        %vm1426 = vmand %vm1424, %vm1425
        %1427 = vst.msk [vmem:[%s549] sm:$0x3] %vm1426, %v1421
        %s1428 = sand.u32 %s364, 1
        %s1429 = scalar_lea.sflag [#allocation5], %s1428
        %s1430 = sand.u32 %s364, 1
        %s1431 = smul.addr %s1430, 2
        %s1432 = scalar_lea.vmem [#allocation4], %s1431
        // Predicated region
        $region119: #{conditional_scalar_estimator_forward.1} parent=113 // pred_check
          %p1433 = pneg %p374
        $region120: #{conditional_scalar_estimator_forward.1} parent=113 // pred_check_branch
          %1435 = sbr.rel (%p1433) target = $region122
        $region121: #{conditional_scalar_estimator_forward.1} parent=113 // pred_region
          %s1436 = smul.u32 2, %s31
          %s1438 = ssub.s32 32, 32
          %1439 = vsyncadd %s1429, %s1438
          %s1440 = smul.addr %s1436, 16
          %s1441 = scalar_lea.hbm %s15, %s1440
          %s1443 = sshll.u32 %s1432, 4
          %s1444 = int_to_ptr.vmem [resolvable:$true] %s1443
          %1446 = dma.vmem_to_hbm [thread:$0]  %s1444, 32, %s1441, %s1429
        $region122: #{conditional_scalar_estimator_forward.1} parent=113 // pred_fallthru
          _
      $region114: #{conditional_scalar_estimator_forward.1} parent=5 // pred_fallthru
        _
      %p1447 = scmp.le.s32.totalorder 2, %s26
      // Predicated region
      $region123: #{conditional_scalar_estimator_forward.1} parent=5 // pred_check
        %p1448 = pneg %p1447
      $region124: #{conditional_scalar_estimator_forward.1} parent=5 // pred_check_branch
        %1450 = sbr.rel (%p1448) target = $region126
      $region125: #{conditional_scalar_estimator_forward.1} parent=5 // pred_region
        %s1451 = ssub.s32 %s26, 2
        // Predicated region
        $region127: #{conditional_scalar_estimator_forward.1} parent=125 // pred_check
          %p1452 = pneg %p380
        $region128: #{conditional_scalar_estimator_forward.1} parent=125 // pred_check_branch
          %1454 = sbr.rel (%p1452) target = $region130
        $region129: #{conditional_scalar_estimator_forward.1} parent=125 // pred_region
          %s1455 = sand.u32 %s365, 1
          %s1456 = scalar_lea.sflag [#allocation5], %s1455
          %s1457 = sand.u32 %s365, 1
          %s1458 = smul.addr %s1457, 2
          %s1459 = scalar_lea.vmem [#allocation4], %s1458
          %1460 = dma.done %s1456, 32
        $region130: #{conditional_scalar_estimator_forward.1} parent=125 // pred_fallthru
          _
      $region126: #{conditional_scalar_estimator_forward.1} parent=5 // pred_fallthru
        _
    $region6: #{conditional_scalar_estimator_forward.1} parent=1 // loop_footer
      %s30 = sadd.s32 1, %s26
    $region7: #{conditional_scalar_estimator_forward.1} parent=1 // loop_footer_branch
      %25 = sbr.rel target = $region3
    $region8: #{conditional_scalar_estimator_forward.1} parent=1 // loop_exit
      _
    %1461 = vsyncpa [#allocation5], 1
    %s1462 = scalar_lea.sflag [#allocation5], 1
    %1463 = vsyncpa %s1462, 1

</llo_original>
